<compile_context>
chip_gen: v6e
topology: v6e:2x2x1
jax: 0.10.0
libtpu: 0.0.40
codegen_flags: <defaults>
</compile_context>

<pallas_src>
import functools

import jax
import jax.numpy as jnp
from jax.experimental import pallas as pl
from jax.experimental.pallas import tpu as pltpu

# bf16 operands (MXU native); flip to jnp.float32 for bit-exact f32 semantics.
COMPUTE_DTYPE = jnp.bfloat16
_SUBLANE = 16 if COMPUTE_DTYPE == jnp.bfloat16 else 8


def _round_up(x, m):
    return (x + m - 1) // m * m


# ---------------------------------------------------------------------------
# Fused DoubleConv kernel: (3x3 conv + folded-BN bias + ReLU) x 2 per image.
# Layout inside the kernel is channels-first, spatially flattened with
# 128-aligned zero margins: (C, lpad + H*W + lpad).
# ---------------------------------------------------------------------------
def _double_conv_kernel(x_ref, w1_ref, b1_ref, w2_ref, b2_ref, mask_ref,
                        o_ref, buf2_ref, acc1_ref, *, H, W, lpad):
    HW = H * W

    # Zero buf2's side margins ONCE; VMEM scratch persists across grid steps
    # and only the [lpad, lpad+HW) centre is overwritten below, so the zero
    # margins (conv2's vertical "SAME" padding) stay valid for every image.
    @pl.when(pl.program_id(0) == 0)
    def _():
        zeros = jnp.zeros((buf2_ref.shape[0], lpad), buf2_ref.dtype)
        buf2_ref[:, :lpad] = zeros
        buf2_ref[:, lpad + HW:] = zeros

    # Column-edge masks, hoisted out of the tap loops.  Vertical boundaries
    # are already covered by the zero margins; only the dx = +-1 taps can wrap
    # across a row edge in the flattened layout and need masking (f32, applied
    # to the f32 contribution -> no bf16 VALU work, v5e-friendly).
    mask_l = mask_ref[0:1, :]        # zero where x == 0      (tap offset -1)
    mask_r = mask_ref[1:2, :]        # zero where x == W - 1  (tap offset +1)

    def taps(window, w_ref, assign, accum):
        """Nine accumulating per-tap MXU matmuls (no im2col slab)."""
        for k in range(9):
            dy, dx = divmod(k, 3)
            s = (dy - 1) * W + (dx - 1)                      # static shift
            contrib = jnp.dot(w_ref[k], window(s),
                              preferred_element_type=jnp.float32)
            if dx == 0:
                contrib = contrib * mask_l
            elif dx == 2:
                contrib = contrib * mask_r
            (assign if k == 0 else accum)(contrib)

    # ---- conv1: margined bf16 input -> f32 accumulator -> bias+ReLU -> bf16
    #      written straight into the centre of conv2's margined buffer.
    def acc1_assign(v):
        acc1_ref[...] = v

    def acc1_accum(v):
        acc1_ref[...] += v

    taps(lambda s: x_ref[0, :, lpad + s:lpad + s + HW], w1_ref,
         acc1_assign, acc1_accum)
    buf2_ref[:, lpad:lpad + HW] = jnp.maximum(
        acc1_ref[...] + b1_ref[...], 0.0).astype(buf2_ref.dtype)

    # ---- conv2: accumulate directly into the (VMEM-resident) f32 output
    #      block, then bias + ReLU in place.
    def o_assign(v):
        o_ref[0] = v

    def o_accum(v):
        o_ref[0] += v

    taps(lambda s: buf2_ref[:, lpad + s:lpad + s + HW], w2_ref,
         o_assign, o_accum)
    # TODO(synk): emit bf16 here to halve HBM writeback (helps v5e most).
    o_ref[0] = jnp.maximum(o_ref[0] + b2_ref[...], 0.0)


def _double_conv_pallas(x_margined, w1r, b1r, w2r, b2r, mask, *, H, W, lpad):
    N, cin_p, bufw = x_margined.shape
    HW = H * W
    # Guard the margin math (per review correctness concerns).
    assert lpad >= W + 1, (lpad, W)
    assert bufw == lpad + HW + lpad, (bufw, lpad, HW)
    assert w1r.shape[0] == 9 and w2r.shape[0] == 9
    mid_p = w1r.shape[1]
    cout_p = w2r.shape[1]
    assert w1r.shape[2] == cin_p and w2r.shape[2] == mid_p

    itemsize = 2 if COMPUTE_DTYPE == jnp.bfloat16 else 4
    flops = 2 * 9 * HW * (cin_p * mid_p + mid_p * cout_p) * N
    bytes_accessed = (x_margined.size * itemsize + N * cout_p * HW * 4
                      + (w1r.size + w2r.size) * itemsize
                      + (b1r.size + b2r.size + mask.size) * 4)
    # Per-step VMEM estimate (double-buffered blocks + scratch); set the
    # scoped limit explicitly (defaults are far below physical VMEM).  Real
    # UNet sizes need the spatial-tiling TODO and a <=~48 MiB budget on v7x.
    vmem_est = (2 * cin_p * bufw * itemsize + 2 * cout_p * HW * 4
                + 2 * (w1r.size + w2r.size) * itemsize
                + 2 * (b1r.size + b2r.size + mask.size) * 4
                + mid_p * bufw * itemsize + mid_p * HW * 4)
    vmem_limit = int(max(32 * 1024 * 1024, 2 * vmem_est))

    kern = functools.partial(_double_conv_kernel, H=H, W=W, lpad=lpad)
    return pl.pallas_call(
        kern,
        out_shape=jax.ShapeDtypeStruct((N, cout_p, HW), jnp.float32),
        grid_spec=pltpu.PrefetchScalarGridSpec(
            num_scalar_prefetch=0,
            grid=(N,),
            in_specs=[
                pl.BlockSpec((1, cin_p, bufw), lambda n: (n, 0, 0)),
                pl.BlockSpec((9, mid_p, cin_p), lambda n: (0, 0, 0)),
                pl.BlockSpec((mid_p, 1), lambda n: (0, 0)),
                pl.BlockSpec((9, cout_p, mid_p), lambda n: (0, 0, 0)),
                pl.BlockSpec((cout_p, 1), lambda n: (0, 0)),
                pl.BlockSpec((2, HW), lambda n: (0, 0)),
            ],
            out_specs=pl.BlockSpec((1, cout_p, HW), lambda n: (n, 0, 0)),
            scratch_shapes=[
                pltpu.VMEM((mid_p, bufw), COMPUTE_DTYPE),   # conv2 margined buf
                pltpu.VMEM((mid_p, HW), jnp.float32),       # conv1 accumulator
            ]),
        compiler_params=pltpu.CompilerParams(
            dimension_semantics=("parallel",),
            vmem_limit_bytes=vmem_limit),
        cost_estimate=pl.CostEstimate(flops=flops, transcendentals=0,
                                      bytes_accessed=bytes_accessed),
    )(x_margined, w1r, b1r, w2r, b2r, mask)


# ---------------------------------------------------------------------------
# Wrapper-side parameter preparation (BN fold, channel padding, per-tap pack).
# ---------------------------------------------------------------------------
def _fold_bn(w_oihw, conv_b, gamma, beta, mean, var, eps=1e-5):
    s = gamma / jnp.sqrt(var + eps)
    return w_oihw * s[:, None, None, None], (conv_b - mean) * s + beta


def _pack_conv_taps(w_oihw, bias, cin_p, cout_p):
    """Zero-pad channels and reshape OIHW -> (9, cout_p, cin_p) per-tap."""
    O, I, KH, KW = w_oihw.shape
    w = jnp.pad(w_oihw, ((0, cout_p - O), (0, cin_p - I), (0, 0), (0, 0)))
    wr = jnp.transpose(w, (2, 3, 0, 1)).reshape(KH * KW, cout_p, cin_p)
    br = jnp.pad(bias, (0, cout_p - O)).reshape(cout_p, 1)
    return wr.astype(COMPUTE_DTYPE), br.astype(jnp.float32)


def _edge_masks(H, W):
    """(2, H*W) f32 masks: row 0 valid for tap offset -1, row 1 for +1."""
    x = jnp.arange(W)
    left = jnp.tile((x >= 1).astype(jnp.float32), H)
    right = jnp.tile((x <= W - 2).astype(jnp.float32), H)
    return jnp.stack([left, right], axis=0)


# ---------------------------------------------------------------------------
# Glue: bilinear x2 upsample (align_corners=True), NCHW.
# TODO(synk): upsample / F.pad / channel concat remain XLA glue (cheap
# gathers); everything stays NCHW so no layout transposes are needed.
# ---------------------------------------------------------------------------
def upsample_bilinear_x2_align_corners(x_nchw):
    N, C, H, W = x_nchw.shape
    Ho, Wo = 2 * H, 2 * W
    ys = jnp.linspace(0.0, H - 1.0, Ho)
    xs = jnp.linspace(0.0, W - 1.0, Wo)
    y0 = jnp.floor(ys).astype(jnp.int32)
    x0 = jnp.floor(xs).astype(jnp.int32)
    y1 = jnp.minimum(y0 + 1, H - 1)
    x1 = jnp.minimum(x0 + 1, W - 1)
    wy = (ys - y0.astype(ys.dtype))[None, None, :, None]
    wx = (xs - x0.astype(xs.dtype))[None, None, None, :]
    v00 = x_nchw[:, :, y0][:, :, :, x0]
    v01 = x_nchw[:, :, y0][:, :, :, x1]
    v10 = x_nchw[:, :, y1][:, :, :, x0]
    v11 = x_nchw[:, :, y1][:, :, :, x1]
    return (v00 * (1 - wy) * (1 - wx) + v01 * (1 - wy) * wx
            + v10 * wy * (1 - wx) + v11 * wy * wx)


# ---------------------------------------------------------------------------
# Up.forward equivalent (bilinear=True, BN in eval mode).  NCHW in / NCHW out.
# ---------------------------------------------------------------------------
def up_forward(params, x1_nchw, x2_nchw):
    x1 = upsample_bilinear_x2_align_corners(x1_nchw)
    dY = x2_nchw.shape[2] - x1.shape[2]
    dX = x2_nchw.shape[3] - x1.shape[3]
    x1 = jnp.pad(x1, ((0, 0), (0, 0),
                      (dY // 2, dY - dY // 2), (dX // 2, dX - dX // 2)))
    x = jnp.concatenate([x2_nchw, x1], axis=1)               # (N, Cin, H, W)
    N, Cin, H, W = x.shape
    HW = H * W

    mid = params["w1"].shape[0]
    cout = params["w2"].shape[0]
    cin_p = _round_up(Cin, _SUBLANE)
    mid_p = _round_up(mid, _SUBLANE)
    cout_p = _round_up(cout, _SUBLANE)
    lpad = _round_up(W + 1, 128)          # 128-aligned zero margin (>= W+1)

    # Fold BatchNorm (eval) into conv weights / bias; pack per-tap.
    w1f, b1f = _fold_bn(params["w1"], params["b1"], params["g1"],
                        params["be1"], params["m1"], params["v1"])
    w2f, b2f = _fold_bn(params["w2"], params["b2"], params["g2"],
                        params["be2"], params["m2"], params["v2"])
    w1r, b1r = _pack_conv_taps(w1f, b1f, cin_p, mid_p)
    w2r, b2r = _pack_conv_taps(w2f, b2f, mid_p, cout_p)

    # channels-first, spatially flattened, channel-padded, zero-MARGINED in
    # the wrapper so the input BlockSpec DMAs directly into conv1's layout.
    xf = jnp.pad(x, ((0, 0), (0, cin_p - Cin), (0, 0), (0, 0)))
    xf = xf.reshape(N, cin_p, HW)
    xf = jnp.pad(xf, ((0, 0), (0, 0), (lpad, lpad))).astype(COMPUTE_DTYPE)

    mask = _edge_masks(H, W)
    y = _double_conv_pallas(xf, w1r, b1r, w2r, b2r, mask, H=H, W=W, lpad=lpad)
    return y[:, :cout, :].reshape(N, cout, H, W)             # crop + NCHW


# ---------------------------------------------------------------------------
# Pure-JAX reference (lax.conv) mirroring the kernel's operand roundings.
# ---------------------------------------------------------------------------
def _ref_conv_bn_relu(x, w, b):
    y = jax.lax.conv_general_dilated(
        x, w, window_strides=(1, 1), padding="SAME",
        dimension_numbers=("NCHW", "OIHW", "NCHW"),
        precision=jax.lax.Precision.HIGHEST)
    return jnp.maximum(y + b[None, :, None, None], 0.0)


def up_forward_ref(params, x1_nchw, x2_nchw):
    x1 = upsample_bilinear_x2_align_corners(x1_nchw)
    dY = x2_nchw.shape[2] - x1.shape[2]
    dX = x2_nchw.shape[3] - x1.shape[3]
    x1 = jnp.pad(x1, ((0, 0), (0, 0),
                      (dY // 2, dY - dY // 2), (dX // 2, dX - dX // 2)))
    x = jnp.concatenate([x2_nchw, x1], axis=1)

    def rnd(a):  # mirror the kernel's bf16 operand rounding (f32 accumulate)
        return a.astype(COMPUTE_DTYPE).astype(jnp.float32)

    w1f, b1f = _fold_bn(params["w1"], params["b1"], params["g1"],
                        params["be1"], params["m1"], params["v1"])
    w2f, b2f = _fold_bn(params["w2"], params["b2"], params["g2"],
                        params["be2"], params["m2"], params["v2"])
    h = _ref_conv_bn_relu(rnd(x), rnd(w1f), b1f)
    y = _ref_conv_bn_relu(rnd(h), rnd(w2f), b2f)
    return y


# ---------------------------------------------------------------------------
# Parameters
# ---------------------------------------------------------------------------
def init_up_params(key, in_channels, out_channels):
    mid = in_channels // 2
    ks = jax.random.split(key, 10)
    p = {}
    p["w1"] = 0.1 * jax.random.normal(ks[0], (mid, in_channels, 3, 3),
                                      jnp.float32)            # OIHW
    p["b1"] = 0.05 * jax.random.normal(ks[1], (mid,), jnp.float32)
    p["g1"] = 1.0 + 0.1 * jax.random.normal(ks[2], (mid,), jnp.float32)
    p["be1"] = 0.1 * jax.random.normal(ks[3], (mid,), jnp.float32)
    p["m1"] = 0.1 * jax.random.normal(ks[4], (mid,), jnp.float32)
    p["v1"] = jnp.abs(1.0 + 0.1 * jax.random.normal(ks[5], (mid,),
                                                    jnp.float32))
    p["w2"] = 0.1 * jax.random.normal(ks[6], (out_channels, mid, 3, 3),
                                      jnp.float32)            # OIHW
    p["b2"] = 0.05 * jax.random.normal(ks[7], (out_channels,), jnp.float32)
    p["g2"] = 1.0 + 0.1 * jax.random.normal(ks[8], (out_channels,),
                                            jnp.float32)
    p["be2"] = 0.1 * jax.random.normal(ks[9], (out_channels,), jnp.float32)
    p["m2"] = jnp.zeros((out_channels,), jnp.float32)
    p["v2"] = jnp.ones((out_channels,), jnp.float32)
    return p


if __name__ == "__main__":
    key = jax.random.PRNGKey(0)
    k_p, k_x1, k_x2 = jax.random.split(key, 3)

    in_channels, out_channels = 8, 4          # DoubleConv(8, 4, mid=4)
    N, H2, W2 = 2, 16, 16                     # x2 spatial size
    # Classic UNet skip: x1 has in_channels//2 channels at half resolution.
    x1 = jax.random.normal(k_x1, (N, in_channels // 2, H2 // 2, W2 // 2),
                           jnp.float32)
    x2 = jax.random.normal(k_x2, (N, in_channels // 2, H2, W2), jnp.float32)

    params = init_up_params(k_p, in_channels, out_channels)

    out = jax.block_until_ready(up_forward(params, x1, x2))
    ref = jax.block_until_ready(up_forward_ref(params, x1, x2))

    assert out.shape == (N, out_channels, H2, W2), out.shape
    err = float(jnp.max(jnp.abs(out - ref)))
    assert jnp.allclose(out, ref, atol=2e-3, rtol=2e-3), err

    print("KERNEL_OK")
</pallas_src>

<mosaic_0001>
module attributes {stable_mosaic.version = 11 : i64} {
  func.func @_double_conv_kernel(%arg0: i32, %arg1: memref<1x16x512xbf16, #tpu.memory_space<vmem>>, %arg2: memref<9x16x16xbf16, #tpu.memory_space<vmem>>, %arg3: memref<16x1xf32, #tpu.memory_space<vmem>>, %arg4: memref<9x16x16xbf16, #tpu.memory_space<vmem>>, %arg5: memref<16x1xf32, #tpu.memory_space<vmem>>, %arg6: memref<2x256xf32, #tpu.memory_space<vmem>>, %arg7: memref<1x16x256xf32, #tpu.memory_space<vmem>>, %arg8: memref<16x512xbf16, #tpu.memory_space<vmem>>, %arg9: memref<16x256xf32, #tpu.memory_space<vmem>>) attributes {dimension_semantics = [#tpu.dimension_semantics<parallel>], iteration_bounds = array<i64: 2>, scalar_prefetch = 0 : i64, scratch_operands = 2 : i64, tpu.core_type = #tpu.core_type<tc>, window_params = [{transform_indices = @transform_0, window_bounds = array<i64: 1, 16, 512>}, {pipeline_mode = #tpu.pipeline_mode<synchronous>, transform_indices = @transform_1, window_bounds = array<i64: 9, 16, 16>}, {pipeline_mode = #tpu.pipeline_mode<synchronous>, transform_indices = @transform_2, window_bounds = array<i64: 16, 1>}, {pipeline_mode = #tpu.pipeline_mode<synchronous>, transform_indices = @transform_3, window_bounds = array<i64: 9, 16, 16>}, {pipeline_mode = #tpu.pipeline_mode<synchronous>, transform_indices = @transform_4, window_bounds = array<i64: 16, 1>}, {pipeline_mode = #tpu.pipeline_mode<synchronous>, transform_indices = @transform_5, window_bounds = array<i64: 2, 256>}, {transform_indices = @transform_6, window_bounds = array<i64: 1, 16, 256>}]} {
    %c0_i32 = arith.constant 0 : i32
    %0 = arith.cmpi eq, %arg0, %c0_i32 : i32
    %1 = arith.extui %0 : i1 to i32
    %c0_i32_0 = arith.constant 0 : i32
    %2 = arith.cmpi ne, %1, %c0_i32_0 : i32
    scf.if %2 {
      %cst_204 = arith.constant 0.000000e+00 : bf16
      %204 = vector.broadcast %cst_204 : bf16 to vector<16x128xbf16>
      %c0_205 = arith.constant 0 : index
      %c0_206 = arith.constant 0 : index
      %205 = vector.load %arg8[%c0_205, %c0_206] : memref<16x512xbf16, #tpu.memory_space<vmem>>, vector<16x128xbf16>
      tpu.vector_store %arg8[%c0_205, %c0_206], %204 {strides = array<i32>} : memref<16x512xbf16, #tpu.memory_space<vmem>>, vector<16x128xbf16>,
      %c0_207 = arith.constant 0 : index
      %c384 = arith.constant 384 : index
      %206 = vector.load %arg8[%c0_207, %c384] : memref<16x512xbf16, #tpu.memory_space<vmem>>, vector<16x128xbf16>
      tpu.vector_store %arg8[%c0_207, %c384], %204 {strides = array<i32>} : memref<16x512xbf16, #tpu.memory_space<vmem>>, vector<16x128xbf16>,
    } else {
    }
    %c0 = arith.constant 0 : index
    %c0_1 = arith.constant 0 : index
    %3 = vector.load %arg6[%c0, %c0_1] : memref<2x256xf32, #tpu.memory_space<vmem>>, vector<1x256xf32>
    %c1 = arith.constant 1 : index
    %c0_2 = arith.constant 0 : index
    %4 = vector.load %arg6[%c1, %c0_2] : memref<2x256xf32, #tpu.memory_space<vmem>>, vector<1x256xf32>
    %c0_3 = arith.constant 0 : index
    %c0_4 = arith.constant 0 : index
    %c0_5 = arith.constant 0 : index
    %5 = vector.load %arg2[%c0_3, %c0_4, %c0_5] : memref<9x16x16xbf16, #tpu.memory_space<vmem>>, vector<1x16x16xbf16>
    %6 = vector.shape_cast %5 : vector<1x16x16xbf16> to vector<16x16xbf16>
    %c0_6 = arith.constant 0 : index
    %c0_7 = arith.constant 0 : index
    %c111 = arith.constant 111 : index
    %7 = vector.load %arg1[%c0_6, %c0_7, %c111] : memref<1x16x512xbf16, #tpu.memory_space<vmem>>, vector<1x16x256xbf16>
    %8 = vector.shape_cast %7 : vector<1x16x256xbf16> to vector<16x256xbf16>
    %cst = arith.constant dense<0.000000e+00> : vector<16x256xf32>
    %9 = tpu.matmul %6, %8, %cst {dimension_numbers = #tpu.dot_dimension_numbers<[1], [0], [0], [1], [0, 0, 1, 1], [], []>} : vector<16x16xbf16>, vector<16x256xbf16>, vector<16x256xf32> -> vector<16x256xf32>
    %10 = vector.broadcast %3 : vector<1x256xf32> to vector<16x256xf32>
    %11 = arith.mulf %9, %10 : vector<16x256xf32>
    %c0_8 = arith.constant 0 : index
    %c0_9 = arith.constant 0 : index
    %12 = vector.load %arg9[%c0_8, %c0_9] : memref<16x256xf32, #tpu.memory_space<vmem>>, vector<16x256xf32>
    tpu.vector_store %arg9[%c0_8, %c0_9], %11 {strides = array<i32>} : memref<16x256xf32, #tpu.memory_space<vmem>>, vector<16x256xf32>,
    %c1_10 = arith.constant 1 : index
    %c0_11 = arith.constant 0 : index
    %c0_12 = arith.constant 0 : index
    %13 = vector.load %arg2[%c1_10, %c0_11, %c0_12] : memref<9x16x16xbf16, #tpu.memory_space<vmem>>, vector<1x16x16xbf16>
    %14 = vector.shape_cast %13 : vector<1x16x16xbf16> to vector<16x16xbf16>
    %c0_13 = arith.constant 0 : index
    %c0_14 = arith.constant 0 : index
    %c112 = arith.constant 112 : index
    %15 = vector.load %arg1[%c0_13, %c0_14, %c112] : memref<1x16x512xbf16, #tpu.memory_space<vmem>>, vector<1x16x256xbf16>
    %16 = vector.shape_cast %15 : vector<1x16x256xbf16> to vector<16x256xbf16>
    %cst_15 = arith.constant dense<0.000000e+00> : vector<16x256xf32>
    %17 = tpu.matmul %14, %16, %cst_15 {dimension_numbers = #tpu.dot_dimension_numbers<[1], [0], [0], [1], [0, 0, 1, 1], [], []>} : vector<16x16xbf16>, vector<16x256xbf16>, vector<16x256xf32> -> vector<16x256xf32>
    %c0_16 = arith.constant 0 : index
    %c0_17 = arith.constant 0 : index
    %18 = vector.load %arg9[%c0_16, %c0_17] : memref<16x256xf32, #tpu.memory_space<vmem>>, vector<16x256xf32>
    %19 = arith.addf %18, %17 : vector<16x256xf32>
    %c0_18 = arith.constant 0 : index
    %c0_19 = arith.constant 0 : index
    %20 = vector.load %arg9[%c0_18, %c0_19] : memref<16x256xf32, #tpu.memory_space<vmem>>, vector<16x256xf32>
    tpu.vector_store %arg9[%c0_18, %c0_19], %19 {strides = array<i32>} : memref<16x256xf32, #tpu.memory_space<vmem>>, vector<16x256xf32>,
    %c2 = arith.constant 2 : index
    %c0_20 = arith.constant 0 : index
    %c0_21 = arith.constant 0 : index
    %21 = vector.load %arg2[%c2, %c0_20, %c0_21] : memref<9x16x16xbf16, #tpu.memory_space<vmem>>, vector<1x16x16xbf16>
    %22 = vector.shape_cast %21 : vector<1x16x16xbf16> to vector<16x16xbf16>
    %c0_22 = arith.constant 0 : index
    %c0_23 = arith.constant 0 : index
    %c113 = arith.constant 113 : index
    %23 = vector.load %arg1[%c0_22, %c0_23, %c113] : memref<1x16x512xbf16, #tpu.memory_space<vmem>>, vector<1x16x256xbf16>
    %24 = vector.shape_cast %23 : vector<1x16x256xbf16> to vector<16x256xbf16>
    %cst_24 = arith.constant dense<0.000000e+00> : vector<16x256xf32>
    %25 = tpu.matmul %22, %24, %cst_24 {dimension_numbers = #tpu.dot_dimension_numbers<[1], [0], [0], [1], [0, 0, 1, 1], [], []>} : vector<16x16xbf16>, vector<16x256xbf16>, vector<16x256xf32> -> vector<16x256xf32>
    %26 = vector.broadcast %4 : vector<1x256xf32> to vector<16x256xf32>
    %27 = arith.mulf %25, %26 : vector<16x256xf32>
    %c0_25 = arith.constant 0 : index
    %c0_26 = arith.constant 0 : index
    %28 = vector.load %arg9[%c0_25, %c0_26] : memref<16x256xf32, #tpu.memory_space<vmem>>, vector<16x256xf32>
    %29 = arith.addf %28, %27 : vector<16x256xf32>
    %c0_27 = arith.constant 0 : index
    %c0_28 = arith.constant 0 : index
    %30 = vector.load %arg9[%c0_27, %c0_28] : memref<16x256xf32, #tpu.memory_space<vmem>>, vector<16x256xf32>
    tpu.vector_store %arg9[%c0_27, %c0_28], %29 {strides = array<i32>} : memref<16x256xf32, #tpu.memory_space<vmem>>, vector<16x256xf32>,
    %c3 = arith.constant 3 : index
    %c0_29 = arith.constant 0 : index
    %c0_30 = arith.constant 0 : index
    %31 = vector.load %arg2[%c3, %c0_29, %c0_30] : memref<9x16x16xbf16, #tpu.memory_space<vmem>>, vector<1x16x16xbf16>
    %32 = vector.shape_cast %31 : vector<1x16x16xbf16> to vector<16x16xbf16>
    %c0_31 = arith.constant 0 : index
    %c0_32 = arith.constant 0 : index
    %c127 = arith.constant 127 : index
    %33 = vector.load %arg1[%c0_31, %c0_32, %c127] : memref<1x16x512xbf16, #tpu.memory_space<vmem>>, vector<1x16x256xbf16>
    %34 = vector.shape_cast %33 : vector<1x16x256xbf16> to vector<16x256xbf16>
    %cst_33 = arith.constant dense<0.000000e+00> : vector<16x256xf32>
    %35 = tpu.matmul %32, %34, %cst_33 {dimension_numbers = #tpu.dot_dimension_numbers<[1], [0], [0], [1], [0, 0, 1, 1], [], []>} : vector<16x16xbf16>, vector<16x256xbf16>, vector<16x256xf32> -> vector<16x256xf32>
    %36 = vector.broadcast %3 : vector<1x256xf32> to vector<16x256xf32>
    %37 = arith.mulf %35, %36 : vector<16x256xf32>
    %c0_34 = arith.constant 0 : index
    %c0_35 = arith.constant 0 : index
    %38 = vector.load %arg9[%c0_34, %c0_35] : memref<16x256xf32, #tpu.memory_space<vmem>>, vector<16x256xf32>
    %39 = arith.addf %38, %37 : vector<16x256xf32>
    %c0_36 = arith.constant 0 : index
    %c0_37 = arith.constant 0 : index
    %40 = vector.load %arg9[%c0_36, %c0_37] : memref<16x256xf32, #tpu.memory_space<vmem>>, vector<16x256xf32>
    tpu.vector_store %arg9[%c0_36, %c0_37], %39 {strides = array<i32>} : memref<16x256xf32, #tpu.memory_space<vmem>>, vector<16x256xf32>,
    %c4 = arith.constant 4 : index
    %c0_38 = arith.constant 0 : index
    %c0_39 = arith.constant 0 : index
    %41 = vector.load %arg2[%c4, %c0_38, %c0_39] : memref<9x16x16xbf16, #tpu.memory_space<vmem>>, vector<1x16x16xbf16>
    %42 = vector.shape_cast %41 : vector<1x16x16xbf16> to vector<16x16xbf16>
    %c0_40 = arith.constant 0 : index
    %c0_41 = arith.constant 0 : index
    %c128 = arith.constant 128 : index
    %43 = vector.load %arg1[%c0_40, %c0_41, %c128] : memref<1x16x512xbf16, #tpu.memory_space<vmem>>, vector<1x16x256xbf16>
    %44 = vector.shape_cast %43 : vector<1x16x256xbf16> to vector<16x256xbf16>
    %cst_42 = arith.constant dense<0.000000e+00> : vector<16x256xf32>
    %45 = tpu.matmul %42, %44, %cst_42 {dimension_numbers = #tpu.dot_dimension_numbers<[1], [0], [0], [1], [0, 0, 1, 1], [], []>} : vector<16x16xbf16>, vector<16x256xbf16>, vector<16x256xf32> -> vector<16x256xf32>
    %c0_43 = arith.constant 0 : index
    %c0_44 = arith.constant 0 : index
    %46 = vector.load %arg9[%c0_43, %c0_44] : memref<16x256xf32, #tpu.memory_space<vmem>>, vector<16x256xf32>
    %47 = arith.addf %46, %45 : vector<16x256xf32>
    %c0_45 = arith.constant 0 : index
    %c0_46 = arith.constant 0 : index
    %48 = vector.load %arg9[%c0_45, %c0_46] : memref<16x256xf32, #tpu.memory_space<vmem>>, vector<16x256xf32>
    tpu.vector_store %arg9[%c0_45, %c0_46], %47 {strides = array<i32>} : memref<16x256xf32, #tpu.memory_space<vmem>>, vector<16x256xf32>,
    %c5 = arith.constant 5 : index
    %c0_47 = arith.constant 0 : index
    %c0_48 = arith.constant 0 : index
    %49 = vector.load %arg2[%c5, %c0_47, %c0_48] : memref<9x16x16xbf16, #tpu.memory_space<vmem>>, vector<1x16x16xbf16>
    %50 = vector.shape_cast %49 : vector<1x16x16xbf16> to vector<16x16xbf16>
    %c0_49 = arith.constant 0 : index
    %c0_50 = arith.constant 0 : index
    %c129 = arith.constant 129 : index
    %51 = vector.load %arg1[%c0_49, %c0_50, %c129] : memref<1x16x512xbf16, #tpu.memory_space<vmem>>, vector<1x16x256xbf16>
    %52 = vector.shape_cast %51 : vector<1x16x256xbf16> to vector<16x256xbf16>
    %cst_51 = arith.constant dense<0.000000e+00> : vector<16x256xf32>
    %53 = tpu.matmul %50, %52, %cst_51 {dimension_numbers = #tpu.dot_dimension_numbers<[1], [0], [0], [1], [0, 0, 1, 1], [], []>} : vector<16x16xbf16>, vector<16x256xbf16>, vector<16x256xf32> -> vector<16x256xf32>
    %54 = vector.broadcast %4 : vector<1x256xf32> to vector<16x256xf32>
    %55 = arith.mulf %53, %54 : vector<16x256xf32>
    %c0_52 = arith.constant 0 : index
    %c0_53 = arith.constant 0 : index
    %56 = vector.load %arg9[%c0_52, %c0_53] : memref<16x256xf32, #tpu.memory_space<vmem>>, vector<16x256xf32>
    %57 = arith.addf %56, %55 : vector<16x256xf32>
    %c0_54 = arith.constant 0 : index
    %c0_55 = arith.constant 0 : index
    %58 = vector.load %arg9[%c0_54, %c0_55] : memref<16x256xf32, #tpu.memory_space<vmem>>, vector<16x256xf32>
    tpu.vector_store %arg9[%c0_54, %c0_55], %57 {strides = array<i32>} : memref<16x256xf32, #tpu.memory_space<vmem>>, vector<16x256xf32>,
    %c6 = arith.constant 6 : index
    %c0_56 = arith.constant 0 : index
    %c0_57 = arith.constant 0 : index
    %59 = vector.load %arg2[%c6, %c0_56, %c0_57] : memref<9x16x16xbf16, #tpu.memory_space<vmem>>, vector<1x16x16xbf16>
    %60 = vector.shape_cast %59 : vector<1x16x16xbf16> to vector<16x16xbf16>
    %c0_58 = arith.constant 0 : index
    %c0_59 = arith.constant 0 : index
    %c143 = arith.constant 143 : index
    %61 = vector.load %arg1[%c0_58, %c0_59, %c143] : memref<1x16x512xbf16, #tpu.memory_space<vmem>>, vector<1x16x256xbf16>
    %62 = vector.shape_cast %61 : vector<1x16x256xbf16> to vector<16x256xbf16>
    %cst_60 = arith.constant dense<0.000000e+00> : vector<16x256xf32>
    %63 = tpu.matmul %60, %62, %cst_60 {dimension_numbers = #tpu.dot_dimension_numbers<[1], [0], [0], [1], [0, 0, 1, 1], [], []>} : vector<16x16xbf16>, vector<16x256xbf16>, vector<16x256xf32> -> vector<16x256xf32>
    %64 = vector.broadcast %3 : vector<1x256xf32> to vector<16x256xf32>
    %65 = arith.mulf %63, %64 : vector<16x256xf32>
    %c0_61 = arith.constant 0 : index
    %c0_62 = arith.constant 0 : index
    %66 = vector.load %arg9[%c0_61, %c0_62] : memref<16x256xf32, #tpu.memory_space<vmem>>, vector<16x256xf32>
    %67 = arith.addf %66, %65 : vector<16x256xf32>
    %c0_63 = arith.constant 0 : index
    %c0_64 = arith.constant 0 : index
    %68 = vector.load %arg9[%c0_63, %c0_64] : memref<16x256xf32, #tpu.memory_space<vmem>>, vector<16x256xf32>
    tpu.vector_store %arg9[%c0_63, %c0_64], %67 {strides = array<i32>} : memref<16x256xf32, #tpu.memory_space<vmem>>, vector<16x256xf32>,
    %c7 = arith.constant 7 : index
    %c0_65 = arith.constant 0 : index
    %c0_66 = arith.constant 0 : index
    %69 = vector.load %arg2[%c7, %c0_65, %c0_66] : memref<9x16x16xbf16, #tpu.memory_space<vmem>>, vector<1x16x16xbf16>
    %70 = vector.shape_cast %69 : vector<1x16x16xbf16> to vector<16x16xbf16>
    %c0_67 = arith.constant 0 : index
    %c0_68 = arith.constant 0 : index
    %c144 = arith.constant 144 : index
    %71 = vector.load %arg1[%c0_67, %c0_68, %c144] : memref<1x16x512xbf16, #tpu.memory_space<vmem>>, vector<1x16x256xbf16>
    %72 = vector.shape_cast %71 : vector<1x16x256xbf16> to vector<16x256xbf16>
    %cst_69 = arith.constant dense<0.000000e+00> : vector<16x256xf32>
    %73 = tpu.matmul %70, %72, %cst_69 {dimension_numbers = #tpu.dot_dimension_numbers<[1], [0], [0], [1], [0, 0, 1, 1], [], []>} : vector<16x16xbf16>, vector<16x256xbf16>, vector<16x256xf32> -> vector<16x256xf32>
    %c0_70 = arith.constant 0 : index
    %c0_71 = arith.constant 0 : index
    %74 = vector.load %arg9[%c0_70, %c0_71] : memref<16x256xf32, #tpu.memory_space<vmem>>, vector<16x256xf32>
    %75 = arith.addf %74, %73 : vector<16x256xf32>
    %c0_72 = arith.constant 0 : index
    %c0_73 = arith.constant 0 : index
    %76 = vector.load %arg9[%c0_72, %c0_73] : memref<16x256xf32, #tpu.memory_space<vmem>>, vector<16x256xf32>
    tpu.vector_store %arg9[%c0_72, %c0_73], %75 {strides = array<i32>} : memref<16x256xf32, #tpu.memory_space<vmem>>, vector<16x256xf32>,
    %c8 = arith.constant 8 : index
    %c0_74 = arith.constant 0 : index
    %c0_75 = arith.constant 0 : index
    %77 = vector.load %arg2[%c8, %c0_74, %c0_75] : memref<9x16x16xbf16, #tpu.memory_space<vmem>>, vector<1x16x16xbf16>
    %78 = vector.shape_cast %77 : vector<1x16x16xbf16> to vector<16x16xbf16>
    %c0_76 = arith.constant 0 : index
    %c0_77 = arith.constant 0 : index
    %c145 = arith.constant 145 : index
    %79 = vector.load %arg1[%c0_76, %c0_77, %c145] : memref<1x16x512xbf16, #tpu.memory_space<vmem>>, vector<1x16x256xbf16>
    %80 = vector.shape_cast %79 : vector<1x16x256xbf16> to vector<16x256xbf16>
    %cst_78 = arith.constant dense<0.000000e+00> : vector<16x256xf32>
    %81 = tpu.matmul %78, %80, %cst_78 {dimension_numbers = #tpu.dot_dimension_numbers<[1], [0], [0], [1], [0, 0, 1, 1], [], []>} : vector<16x16xbf16>, vector<16x256xbf16>, vector<16x256xf32> -> vector<16x256xf32>
    %82 = vector.broadcast %4 : vector<1x256xf32> to vector<16x256xf32>
    %83 = arith.mulf %81, %82 : vector<16x256xf32>
    %c0_79 = arith.constant 0 : index
    %c0_80 = arith.constant 0 : index
    %84 = vector.load %arg9[%c0_79, %c0_80] : memref<16x256xf32, #tpu.memory_space<vmem>>, vector<16x256xf32>
    %85 = arith.addf %84, %83 : vector<16x256xf32>
    %c0_81 = arith.constant 0 : index
    %c0_82 = arith.constant 0 : index
    %86 = vector.load %arg9[%c0_81, %c0_82] : memref<16x256xf32, #tpu.memory_space<vmem>>, vector<16x256xf32>
    tpu.vector_store %arg9[%c0_81, %c0_82], %85 {strides = array<i32>} : memref<16x256xf32, #tpu.memory_space<vmem>>, vector<16x256xf32>,
    %c0_83 = arith.constant 0 : index
    %c0_84 = arith.constant 0 : index
    %87 = vector.load %arg9[%c0_83, %c0_84] : memref<16x256xf32, #tpu.memory_space<vmem>>, vector<16x256xf32>
    %c0_85 = arith.constant 0 : index
    %c0_86 = arith.constant 0 : index
    %88 = vector.load %arg3[%c0_85, %c0_86] : memref<16x1xf32, #tpu.memory_space<vmem>>, vector<16x1xf32>
    %89 = vector.broadcast %88 : vector<16x1xf32> to vector<16x256xf32>
    %90 = arith.addf %87, %89 : vector<16x256xf32>
    %cst_87 = arith.constant 0.000000e+00 : f32
    %91 = vector.broadcast %cst_87 : f32 to vector<16x256xf32>
    %92 = arith.maximumf %90, %91 : vector<16x256xf32>
    %93 = arith.truncf %92 : vector<16x256xf32> to vector<16x256xbf16>
    %c0_88 = arith.constant 0 : index
    %c128_89 = arith.constant 128 : index
    %94 = vector.load %arg8[%c0_88, %c128_89] : memref<16x512xbf16, #tpu.memory_space<vmem>>, vector<16x256xbf16>
    tpu.vector_store %arg8[%c0_88, %c128_89], %93 {strides = array<i32>} : memref<16x512xbf16, #tpu.memory_space<vmem>>, vector<16x256xbf16>,
    %c0_90 = arith.constant 0 : index
    %c0_91 = arith.constant 0 : index
    %c0_92 = arith.constant 0 : index
    %95 = vector.load %arg4[%c0_90, %c0_91, %c0_92] : memref<9x16x16xbf16, #tpu.memory_space<vmem>>, vector<1x16x16xbf16>
    %96 = vector.shape_cast %95 : vector<1x16x16xbf16> to vector<16x16xbf16>
    %c0_93 = arith.constant 0 : index
    %c111_94 = arith.constant 111 : index
    %97 = vector.load %arg8[%c0_93, %c111_94] : memref<16x512xbf16, #tpu.memory_space<vmem>>, vector<16x256xbf16>
    %cst_95 = arith.constant dense<0.000000e+00> : vector<16x256xf32>
    %98 = tpu.matmul %96, %97, %cst_95 {dimension_numbers = #tpu.dot_dimension_numbers<[1], [0], [0], [1], [0, 0, 1, 1], [], []>} : vector<16x16xbf16>, vector<16x256xbf16>, vector<16x256xf32> -> vector<16x256xf32>
    %99 = vector.broadcast %3 : vector<1x256xf32> to vector<16x256xf32>
    %100 = arith.mulf %98, %99 : vector<16x256xf32>
    %c0_96 = arith.constant 0 : index
    %c0_97 = arith.constant 0 : index
    %c0_98 = arith.constant 0 : index
    %101 = vector.load %arg7[%c0_96, %c0_97, %c0_98] : memref<1x16x256xf32, #tpu.memory_space<vmem>>, vector<1x16x256xf32>
    %102 = vector.shape_cast %101 : vector<1x16x256xf32> to vector<16x256xf32>
    %103 = vector.shape_cast %100 : vector<16x256xf32> to vector<1x16x256xf32>
    tpu.vector_store %arg7[%c0_96, %c0_97, %c0_98], %103 {strides = array<i32>} : memref<1x16x256xf32, #tpu.memory_space<vmem>>, vector<1x16x256xf32>,
    %c1_99 = arith.constant 1 : index
    %c0_100 = arith.constant 0 : index
    %c0_101 = arith.constant 0 : index
    %104 = vector.load %arg4[%c1_99, %c0_100, %c0_101] : memref<9x16x16xbf16, #tpu.memory_space<vmem>>, vector<1x16x16xbf16>
    %105 = vector.shape_cast %104 : vector<1x16x16xbf16> to vector<16x16xbf16>
    %c0_102 = arith.constant 0 : index
    %c112_103 = arith.constant 112 : index
    %106 = vector.load %arg8[%c0_102, %c112_103] : memref<16x512xbf16, #tpu.memory_space<vmem>>, vector<16x256xbf16>
    %cst_104 = arith.constant dense<0.000000e+00> : vector<16x256xf32>
    %107 = tpu.matmul %105, %106, %cst_104 {dimension_numbers = #tpu.dot_dimension_numbers<[1], [0], [0], [1], [0, 0, 1, 1], [], []>} : vector<16x16xbf16>, vector<16x256xbf16>, vector<16x256xf32> -> vector<16x256xf32>
    %c0_105 = arith.constant 0 : index
    %c0_106 = arith.constant 0 : index
    %c0_107 = arith.constant 0 : index
    %108 = vector.load %arg7[%c0_105, %c0_106, %c0_107] : memref<1x16x256xf32, #tpu.memory_space<vmem>>, vector<1x16x256xf32>
    %109 = vector.shape_cast %108 : vector<1x16x256xf32> to vector<16x256xf32>
    %110 = arith.addf %109, %107 : vector<16x256xf32>
    %c0_108 = arith.constant 0 : index
    %c0_109 = arith.constant 0 : index
    %c0_110 = arith.constant 0 : index
    %111 = vector.load %arg7[%c0_108, %c0_109, %c0_110] : memref<1x16x256xf32, #tpu.memory_space<vmem>>, vector<1x16x256xf32>
    %112 = vector.shape_cast %111 : vector<1x16x256xf32> to vector<16x256xf32>
    %113 = vector.shape_cast %110 : vector<16x256xf32> to vector<1x16x256xf32>
    tpu.vector_store %arg7[%c0_108, %c0_109, %c0_110], %113 {strides = array<i32>} : memref<1x16x256xf32, #tpu.memory_space<vmem>>, vector<1x16x256xf32>,
    %c2_111 = arith.constant 2 : index
    %c0_112 = arith.constant 0 : index
    %c0_113 = arith.constant 0 : index
    %114 = vector.load %arg4[%c2_111, %c0_112, %c0_113] : memref<9x16x16xbf16, #tpu.memory_space<vmem>>, vector<1x16x16xbf16>
    %115 = vector.shape_cast %114 : vector<1x16x16xbf16> to vector<16x16xbf16>
    %c0_114 = arith.constant 0 : index
    %c113_115 = arith.constant 113 : index
    %116 = vector.load %arg8[%c0_114, %c113_115] : memref<16x512xbf16, #tpu.memory_space<vmem>>, vector<16x256xbf16>
    %cst_116 = arith.constant dense<0.000000e+00> : vector<16x256xf32>
    %117 = tpu.matmul %115, %116, %cst_116 {dimension_numbers = #tpu.dot_dimension_numbers<[1], [0], [0], [1], [0, 0, 1, 1], [], []>} : vector<16x16xbf16>, vector<16x256xbf16>, vector<16x256xf32> -> vector<16x256xf32>
    %118 = vector.broadcast %4 : vector<1x256xf32> to vector<16x256xf32>
    %119 = arith.mulf %117, %118 : vector<16x256xf32>
    %c0_117 = arith.constant 0 : index
    %c0_118 = arith.constant 0 : index
    %c0_119 = arith.constant 0 : index
    %120 = vector.load %arg7[%c0_117, %c0_118, %c0_119] : memref<1x16x256xf32, #tpu.memory_space<vmem>>, vector<1x16x256xf32>
    %121 = vector.shape_cast %120 : vector<1x16x256xf32> to vector<16x256xf32>
    %122 = arith.addf %121, %119 : vector<16x256xf32>
    %c0_120 = arith.constant 0 : index
    %c0_121 = arith.constant 0 : index
    %c0_122 = arith.constant 0 : index
    %123 = vector.load %arg7[%c0_120, %c0_121, %c0_122] : memref<1x16x256xf32, #tpu.memory_space<vmem>>, vector<1x16x256xf32>
    %124 = vector.shape_cast %123 : vector<1x16x256xf32> to vector<16x256xf32>
    %125 = vector.shape_cast %122 : vector<16x256xf32> to vector<1x16x256xf32>
    tpu.vector_store %arg7[%c0_120, %c0_121, %c0_122], %125 {strides = array<i32>} : memref<1x16x256xf32, #tpu.memory_space<vmem>>, vector<1x16x256xf32>,
    %c3_123 = arith.constant 3 : index
    %c0_124 = arith.constant 0 : index
    %c0_125 = arith.constant 0 : index
    %126 = vector.load %arg4[%c3_123, %c0_124, %c0_125] : memref<9x16x16xbf16, #tpu.memory_space<vmem>>, vector<1x16x16xbf16>
    %127 = vector.shape_cast %126 : vector<1x16x16xbf16> to vector<16x16xbf16>
    %c0_126 = arith.constant 0 : index
    %c127_127 = arith.constant 127 : index
    %128 = vector.load %arg8[%c0_126, %c127_127] : memref<16x512xbf16, #tpu.memory_space<vmem>>, vector<16x256xbf16>
    %cst_128 = arith.constant dense<0.000000e+00> : vector<16x256xf32>
    %129 = tpu.matmul %127, %128, %cst_128 {dimension_numbers = #tpu.dot_dimension_numbers<[1], [0], [0], [1], [0, 0, 1, 1], [], []>} : vector<16x16xbf16>, vector<16x256xbf16>, vector<16x256xf32> -> vector<16x256xf32>
    %130 = vector.broadcast %3 : vector<1x256xf32> to vector<16x256xf32>
    %131 = arith.mulf %129, %130 : vector<16x256xf32>
    %c0_129 = arith.constant 0 : index
    %c0_130 = arith.constant 0 : index
    %c0_131 = arith.constant 0 : index
    %132 = vector.load %arg7[%c0_129, %c0_130, %c0_131] : memref<1x16x256xf32, #tpu.memory_space<vmem>>, vector<1x16x256xf32>
    %133 = vector.shape_cast %132 : vector<1x16x256xf32> to vector<16x256xf32>
    %134 = arith.addf %133, %131 : vector<16x256xf32>
    %c0_132 = arith.constant 0 : index
    %c0_133 = arith.constant 0 : index
    %c0_134 = arith.constant 0 : index
    %135 = vector.load %arg7[%c0_132, %c0_133, %c0_134] : memref<1x16x256xf32, #tpu.memory_space<vmem>>, vector<1x16x256xf32>
    %136 = vector.shape_cast %135 : vector<1x16x256xf32> to vector<16x256xf32>
    %137 = vector.shape_cast %134 : vector<16x256xf32> to vector<1x16x256xf32>
    tpu.vector_store %arg7[%c0_132, %c0_133, %c0_134], %137 {strides = array<i32>} : memref<1x16x256xf32, #tpu.memory_space<vmem>>, vector<1x16x256xf32>,
    %c4_135 = arith.constant 4 : index
    %c0_136 = arith.constant 0 : index
    %c0_137 = arith.constant 0 : index
    %138 = vector.load %arg4[%c4_135, %c0_136, %c0_137] : memref<9x16x16xbf16, #tpu.memory_space<vmem>>, vector<1x16x16xbf16>
    %139 = vector.shape_cast %138 : vector<1x16x16xbf16> to vector<16x16xbf16>
    %c0_138 = arith.constant 0 : index
    %c128_139 = arith.constant 128 : index
    %140 = vector.load %arg8[%c0_138, %c128_139] : memref<16x512xbf16, #tpu.memory_space<vmem>>, vector<16x256xbf16>
    %cst_140 = arith.constant dense<0.000000e+00> : vector<16x256xf32>
    %141 = tpu.matmul %139, %140, %cst_140 {dimension_numbers = #tpu.dot_dimension_numbers<[1], [0], [0], [1], [0, 0, 1, 1], [], []>} : vector<16x16xbf16>, vector<16x256xbf16>, vector<16x256xf32> -> vector<16x256xf32>
    %c0_141 = arith.constant 0 : index
    %c0_142 = arith.constant 0 : index
    %c0_143 = arith.constant 0 : index
    %142 = vector.load %arg7[%c0_141, %c0_142, %c0_143] : memref<1x16x256xf32, #tpu.memory_space<vmem>>, vector<1x16x256xf32>
    %143 = vector.shape_cast %142 : vector<1x16x256xf32> to vector<16x256xf32>
    %144 = arith.addf %143, %141 : vector<16x256xf32>
    %c0_144 = arith.constant 0 : index
    %c0_145 = arith.constant 0 : index
    %c0_146 = arith.constant 0 : index
    %145 = vector.load %arg7[%c0_144, %c0_145, %c0_146] : memref<1x16x256xf32, #tpu.memory_space<vmem>>, vector<1x16x256xf32>
    %146 = vector.shape_cast %145 : vector<1x16x256xf32> to vector<16x256xf32>
    %147 = vector.shape_cast %144 : vector<16x256xf32> to vector<1x16x256xf32>
    tpu.vector_store %arg7[%c0_144, %c0_145, %c0_146], %147 {strides = array<i32>} : memref<1x16x256xf32, #tpu.memory_space<vmem>>, vector<1x16x256xf32>,
    %c5_147 = arith.constant 5 : index
    %c0_148 = arith.constant 0 : index
    %c0_149 = arith.constant 0 : index
    %148 = vector.load %arg4[%c5_147, %c0_148, %c0_149] : memref<9x16x16xbf16, #tpu.memory_space<vmem>>, vector<1x16x16xbf16>
    %149 = vector.shape_cast %148 : vector<1x16x16xbf16> to vector<16x16xbf16>
    %c0_150 = arith.constant 0 : index
    %c129_151 = arith.constant 129 : index
    %150 = vector.load %arg8[%c0_150, %c129_151] : memref<16x512xbf16, #tpu.memory_space<vmem>>, vector<16x256xbf16>
    %cst_152 = arith.constant dense<0.000000e+00> : vector<16x256xf32>
    %151 = tpu.matmul %149, %150, %cst_152 {dimension_numbers = #tpu.dot_dimension_numbers<[1], [0], [0], [1], [0, 0, 1, 1], [], []>} : vector<16x16xbf16>, vector<16x256xbf16>, vector<16x256xf32> -> vector<16x256xf32>
    %152 = vector.broadcast %4 : vector<1x256xf32> to vector<16x256xf32>
    %153 = arith.mulf %151, %152 : vector<16x256xf32>
    %c0_153 = arith.constant 0 : index
    %c0_154 = arith.constant 0 : index
    %c0_155 = arith.constant 0 : index
    %154 = vector.load %arg7[%c0_153, %c0_154, %c0_155] : memref<1x16x256xf32, #tpu.memory_space<vmem>>, vector<1x16x256xf32>
    %155 = vector.shape_cast %154 : vector<1x16x256xf32> to vector<16x256xf32>
    %156 = arith.addf %155, %153 : vector<16x256xf32>
    %c0_156 = arith.constant 0 : index
    %c0_157 = arith.constant 0 : index
    %c0_158 = arith.constant 0 : index
    %157 = vector.load %arg7[%c0_156, %c0_157, %c0_158] : memref<1x16x256xf32, #tpu.memory_space<vmem>>, vector<1x16x256xf32>
    %158 = vector.shape_cast %157 : vector<1x16x256xf32> to vector<16x256xf32>
    %159 = vector.shape_cast %156 : vector<16x256xf32> to vector<1x16x256xf32>
    tpu.vector_store %arg7[%c0_156, %c0_157, %c0_158], %159 {strides = array<i32>} : memref<1x16x256xf32, #tpu.memory_space<vmem>>, vector<1x16x256xf32>,
    %c6_159 = arith.constant 6 : index
    %c0_160 = arith.constant 0 : index
    %c0_161 = arith.constant 0 : index
    %160 = vector.load %arg4[%c6_159, %c0_160, %c0_161] : memref<9x16x16xbf16, #tpu.memory_space<vmem>>, vector<1x16x16xbf16>
    %161 = vector.shape_cast %160 : vector<1x16x16xbf16> to vector<16x16xbf16>
    %c0_162 = arith.constant 0 : index
    %c143_163 = arith.constant 143 : index
    %162 = vector.load %arg8[%c0_162, %c143_163] : memref<16x512xbf16, #tpu.memory_space<vmem>>, vector<16x256xbf16>
    %cst_164 = arith.constant dense<0.000000e+00> : vector<16x256xf32>
    %163 = tpu.matmul %161, %162, %cst_164 {dimension_numbers = #tpu.dot_dimension_numbers<[1], [0], [0], [1], [0, 0, 1, 1], [], []>} : vector<16x16xbf16>, vector<16x256xbf16>, vector<16x256xf32> -> vector<16x256xf32>
    %164 = vector.broadcast %3 : vector<1x256xf32> to vector<16x256xf32>
    %165 = arith.mulf %163, %164 : vector<16x256xf32>
    %c0_165 = arith.constant 0 : index
    %c0_166 = arith.constant 0 : index
    %c0_167 = arith.constant 0 : index
    %166 = vector.load %arg7[%c0_165, %c0_166, %c0_167] : memref<1x16x256xf32, #tpu.memory_space<vmem>>, vector<1x16x256xf32>
    %167 = vector.shape_cast %166 : vector<1x16x256xf32> to vector<16x256xf32>
    %168 = arith.addf %167, %165 : vector<16x256xf32>
    %c0_168 = arith.constant 0 : index
    %c0_169 = arith.constant 0 : index
    %c0_170 = arith.constant 0 : index
    %169 = vector.load %arg7[%c0_168, %c0_169, %c0_170] : memref<1x16x256xf32, #tpu.memory_space<vmem>>, vector<1x16x256xf32>
    %170 = vector.shape_cast %169 : vector<1x16x256xf32> to vector<16x256xf32>
    %171 = vector.shape_cast %168 : vector<16x256xf32> to vector<1x16x256xf32>
    tpu.vector_store %arg7[%c0_168, %c0_169, %c0_170], %171 {strides = array<i32>} : memref<1x16x256xf32, #tpu.memory_space<vmem>>, vector<1x16x256xf32>,
    %c7_171 = arith.constant 7 : index
    %c0_172 = arith.constant 0 : index
    %c0_173 = arith.constant 0 : index
    %172 = vector.load %arg4[%c7_171, %c0_172, %c0_173] : memref<9x16x16xbf16, #tpu.memory_space<vmem>>, vector<1x16x16xbf16>
    %173 = vector.shape_cast %172 : vector<1x16x16xbf16> to vector<16x16xbf16>
    %c0_174 = arith.constant 0 : index
    %c144_175 = arith.constant 144 : index
    %174 = vector.load %arg8[%c0_174, %c144_175] : memref<16x512xbf16, #tpu.memory_space<vmem>>, vector<16x256xbf16>
    %cst_176 = arith.constant dense<0.000000e+00> : vector<16x256xf32>
    %175 = tpu.matmul %173, %174, %cst_176 {dimension_numbers = #tpu.dot_dimension_numbers<[1], [0], [0], [1], [0, 0, 1, 1], [], []>} : vector<16x16xbf16>, vector<16x256xbf16>, vector<16x256xf32> -> vector<16x256xf32>
    %c0_177 = arith.constant 0 : index
    %c0_178 = arith.constant 0 : index
    %c0_179 = arith.constant 0 : index
    %176 = vector.load %arg7[%c0_177, %c0_178, %c0_179] : memref<1x16x256xf32, #tpu.memory_space<vmem>>, vector<1x16x256xf32>
    %177 = vector.shape_cast %176 : vector<1x16x256xf32> to vector<16x256xf32>
    %178 = arith.addf %177, %175 : vector<16x256xf32>
    %c0_180 = arith.constant 0 : index
    %c0_181 = arith.constant 0 : index
    %c0_182 = arith.constant 0 : index
    %179 = vector.load %arg7[%c0_180, %c0_181, %c0_182] : memref<1x16x256xf32, #tpu.memory_space<vmem>>, vector<1x16x256xf32>
    %180 = vector.shape_cast %179 : vector<1x16x256xf32> to vector<16x256xf32>
    %181 = vector.shape_cast %178 : vector<16x256xf32> to vector<1x16x256xf32>
    tpu.vector_store %arg7[%c0_180, %c0_181, %c0_182], %181 {strides = array<i32>} : memref<1x16x256xf32, #tpu.memory_space<vmem>>, vector<1x16x256xf32>,
    %c8_183 = arith.constant 8 : index
    %c0_184 = arith.constant 0 : index
    %c0_185 = arith.constant 0 : index
    %182 = vector.load %arg4[%c8_183, %c0_184, %c0_185] : memref<9x16x16xbf16, #tpu.memory_space<vmem>>, vector<1x16x16xbf16>
    %183 = vector.shape_cast %182 : vector<1x16x16xbf16> to vector<16x16xbf16>
    %c0_186 = arith.constant 0 : index
    %c145_187 = arith.constant 145 : index
    %184 = vector.load %arg8[%c0_186, %c145_187] : memref<16x512xbf16, #tpu.memory_space<vmem>>, vector<16x256xbf16>
    %cst_188 = arith.constant dense<0.000000e+00> : vector<16x256xf32>
    %185 = tpu.matmul %183, %184, %cst_188 {dimension_numbers = #tpu.dot_dimension_numbers<[1], [0], [0], [1], [0, 0, 1, 1], [], []>} : vector<16x16xbf16>, vector<16x256xbf16>, vector<16x256xf32> -> vector<16x256xf32>
    %186 = vector.broadcast %4 : vector<1x256xf32> to vector<16x256xf32>
    %187 = arith.mulf %185, %186 : vector<16x256xf32>
    %c0_189 = arith.constant 0 : index
    %c0_190 = arith.constant 0 : index
    %c0_191 = arith.constant 0 : index
    %188 = vector.load %arg7[%c0_189, %c0_190, %c0_191] : memref<1x16x256xf32, #tpu.memory_space<vmem>>, vector<1x16x256xf32>
    %189 = vector.shape_cast %188 : vector<1x16x256xf32> to vector<16x256xf32>
    %190 = arith.addf %189, %187 : vector<16x256xf32>
    %c0_192 = arith.constant 0 : index
    %c0_193 = arith.constant 0 : index
    %c0_194 = arith.constant 0 : index
    %191 = vector.load %arg7[%c0_192, %c0_193, %c0_194] : memref<1x16x256xf32, #tpu.memory_space<vmem>>, vector<1x16x256xf32>
    %192 = vector.shape_cast %191 : vector<1x16x256xf32> to vector<16x256xf32>
    %193 = vector.shape_cast %190 : vector<16x256xf32> to vector<1x16x256xf32>
    tpu.vector_store %arg7[%c0_192, %c0_193, %c0_194], %193 {strides = array<i32>} : memref<1x16x256xf32, #tpu.memory_space<vmem>>, vector<1x16x256xf32>,
    %c0_195 = arith.constant 0 : index
    %c0_196 = arith.constant 0 : index
    %c0_197 = arith.constant 0 : index
    %194 = vector.load %arg7[%c0_195, %c0_196, %c0_197] : memref<1x16x256xf32, #tpu.memory_space<vmem>>, vector<1x16x256xf32>
    %195 = vector.shape_cast %194 : vector<1x16x256xf32> to vector<16x256xf32>
    %c0_198 = arith.constant 0 : index
    %c0_199 = arith.constant 0 : index
    %196 = vector.load %arg5[%c0_198, %c0_199] : memref<16x1xf32, #tpu.memory_space<vmem>>, vector<16x1xf32>
    %197 = vector.broadcast %196 : vector<16x1xf32> to vector<16x256xf32>
    %198 = arith.addf %195, %197 : vector<16x256xf32>
    %cst_200 = arith.constant 0.000000e+00 : f32
    %199 = vector.broadcast %cst_200 : f32 to vector<16x256xf32>
    %200 = arith.maximumf %198, %199 : vector<16x256xf32>
    %c0_201 = arith.constant 0 : index
    %c0_202 = arith.constant 0 : index
    %c0_203 = arith.constant 0 : index
    %201 = vector.load %arg7[%c0_201, %c0_202, %c0_203] : memref<1x16x256xf32, #tpu.memory_space<vmem>>, vector<1x16x256xf32>
    %202 = vector.shape_cast %201 : vector<1x16x256xf32> to vector<16x256xf32>
    %203 = vector.shape_cast %200 : vector<16x256xf32> to vector<1x16x256xf32>
    tpu.vector_store %arg7[%c0_201, %c0_202, %c0_203], %203 {strides = array<i32>} : memref<1x16x256xf32, #tpu.memory_space<vmem>>, vector<1x16x256xf32>,
    return
  }
  func.func @transform_0(%arg0: i32) -> (i32, i32, i32) {
    %c0_i32 = arith.constant 0 : i32
    %c0_i32_0 = arith.constant 0 : i32
    %c0_i32_1 = arith.constant 0 : i32
    return %arg0, %c0_i32, %c0_i32_0 : i32, i32, i32
  }
  func.func @transform_1(%arg0: i32) -> (i32, i32, i32) {
    %c0_i32 = arith.constant 0 : i32
    %c0_i32_0 = arith.constant 0 : i32
    %c0_i32_1 = arith.constant 0 : i32
    %c0_i32_2 = arith.constant 0 : i32
    return %c0_i32, %c0_i32_0, %c0_i32_1 : i32, i32, i32
  }
  func.func @transform_2(%arg0: i32) -> (i32, i32) {
    %c0_i32 = arith.constant 0 : i32
    %c0_i32_0 = arith.constant 0 : i32
    %c0_i32_1 = arith.constant 0 : i32
    return %c0_i32, %c0_i32_0 : i32, i32
  }
  func.func @transform_3(%arg0: i32) -> (i32, i32, i32) {
    %c0_i32 = arith.constant 0 : i32
    %c0_i32_0 = arith.constant 0 : i32
    %c0_i32_1 = arith.constant 0 : i32
    %c0_i32_2 = arith.constant 0 : i32
    return %c0_i32, %c0_i32_0, %c0_i32_1 : i32, i32, i32
  }
  func.func @transform_4(%arg0: i32) -> (i32, i32) {
    %c0_i32 = arith.constant 0 : i32
    %c0_i32_0 = arith.constant 0 : i32
    %c0_i32_1 = arith.constant 0 : i32
    return %c0_i32, %c0_i32_0 : i32, i32
  }
  func.func @transform_5(%arg0: i32) -> (i32, i32) {
    %c0_i32 = arith.constant 0 : i32
    %c0_i32_0 = arith.constant 0 : i32
    %c0_i32_1 = arith.constant 0 : i32
    return %c0_i32, %c0_i32_0 : i32, i32
  }
  func.func @transform_6(%arg0: i32) -> (i32, i32, i32) {
    %c0_i32 = arith.constant 0 : i32
    %c0_i32_0 = arith.constant 0 : i32
    %c0_i32_1 = arith.constant 0 : i32
    return %arg0, %c0_i32, %c0_i32_0 : i32, i32, i32
  }
}

</mosaic_0001>

<llo_original>
// kernel: tpu_custom_call.1
$region0: #{tpu_custom_call.1}
  #allocation0 [shape = 'u32[]', space=smem, size = 0x4, offset = 0x4, fixed_abs, tag = 'smem constant byte address 0x4 - core index']
  #allocation1 [shape = 'u32[144,128]{1,0:T(1,128)}', space=vmem, size = 0x12000, scoped, tag = 'internal scratch']
  #allocation2 [shape = 'bf16[16,512]{1,0:T(8,128)(2,1)}', space=vmem, size = 0x4000, scoped, tag = 'scratch operand']
  #allocation3 [shape = 'f32[16,256]{1,0:T(8,128)}', space=vmem, size = 0x4000, scoped, tag = 'scratch operand']
  %s0 = inlined_call_operand.hbm [shape: bf16[2,16,512], index: 0, kind: input, shape index: {}]
  %s1 = inlined_call_operand.hbm [shape: bf16[9,16,16], index: 1, kind: input, shape index: {}]
  %s2 = inlined_call_operand.vmem [shape: f32[16,1], index: 2, kind: input, shape index: {}]
  %s3 = inlined_call_operand.hbm [shape: bf16[9,16,16], index: 3, kind: input, shape index: {}]
  %s4 = inlined_call_operand.vmem [shape: f32[16,1], index: 4, kind: input, shape index: {}]
  %s5 = inlined_call_operand.vmem [shape: f32[2,256], index: 5, kind: input, shape index: {}]
  %s6 = inlined_call_operand.hbm [shape: f32[2,16,256], index: 6, kind: output, shape index: {}]
  %s7 = sld [smem:[#allocation0]]
  $region73: #{tpu_custom_call.1} parent=0
    _
  %s9 = ssub.s32 1, %s7
  %s10 = scalar_select 0, %s9, %s7
  $region1: #{tpu_custom_call.1} parent=0
    #allocation4 [shape = 'u8[32768]{0}', space=vmem, size = 0x8000, scoped, tag = 'input window, operand 0']
    #allocation5 [shape = 's32[2]{0}', space=sflag, size = 0x8, scoped, tag = 'scoped memory for tpu_custom_call.1']
    #allocation6 [shape = 's32[2]{0}', space=sflag, size = 0x8, scoped, tag = 'scoped memory for tpu_custom_call.1']
    #allocation7 [shape = 'u8[36864]{0}', space=vmem, size = 0x9000, scoped, tag = 'input window, operand 1, single buffered']
    #allocation8 [shape = 's32[1]{0}', space=sflag, size = 0x4, scoped, tag = 'scoped memory for tpu_custom_call.1']
    #allocation9 [shape = 'u8[36864]{0}', space=vmem, size = 0x9000, scoped, tag = 'input window, operand 3, single buffered']
    #allocation10 [shape = 'u8[32768]{0}', space=vmem, size = 0x8000, scoped, tag = 'output window, operand 0']
    %11 = vsyncpa [#allocation5], 0
    %s12 = scalar_lea.sflag [#allocation5], 1
    %13 = vsyncpa %s12, 0
    %14 = vsyncpa [#allocation8], 0
    %15 = vsyncpa [#allocation6], 0
    %s16 = scalar_lea.sflag [#allocation6], 1
    %17 = vsyncpa %s16, 0
    loop: start=0, step=1, limit=4
    $region2: #{tpu_custom_call.1} parent=1 // loop_pre_header
      _
    $region3: #{tpu_custom_call.1} parent=1 // loop_header
      %s19 = sphi 0, %s23
      %p20 = scmp.ge.s32.totalorder %s19, 4
      %s29 = sphi 0, %s31
      %s32 = sphi 0, %s29
      %s33 = sphi 0, %s32
      %s49 = sphi 0, %s33
      %s53 = sphi 0, %s53
      %s55 = sphi 0, %s53
      %s56 = sphi 0, %s55
      %s70 = sphi 0, %s56
      %s74 = sphi 0, %s74
      %s76 = sphi 0, %s74
      %s77 = sphi 0, %s76
      %s91 = sphi 0, %s77
      %s95 = sphi 0, %s95
      %s97 = sphi 0, %s95
      %s98 = sphi 0, %s97
      %s112 = sphi 0, %s98
      %s116 = sphi 0, %s116
      %s118 = sphi 0, %s116
      %s119 = sphi 0, %s118
      %s133 = sphi 0, %s119
      %s137 = sphi 0, %s137
      %s139 = sphi 0, %s137
      %s140 = sphi 0, %s139
      %s154 = sphi 0, %s140
      %s160 = sphi 0, %s162
      %s163 = sphi 0, %s160
      %s164 = sphi 0, %s163
      %s180 = sphi 0, %s164
    $region4: #{tpu_custom_call.1} parent=1 // loop_header_branch
      %22 = sbr.rel (%p20) target = $region8
    $region5: #{tpu_custom_call.1} parent=1 // loop_body
      %s24 = ssub.s32 %s19, 1
      %s25 = ssub.s32 %s19, 2
      %s26 = sadd.s32 %s19, 1
      %s27 = ssub.s32 %s19, %s26
      %p28 = scmp.eq.s32.totalorder %s27, 0
      %s30 = sadd.s32 %s29, 1
      %s31 = scalar_select %p28, %s29, %s30
      %p34 = pneg %p28
      %p35 = scmp.eq.s32.totalorder %s19, 1
      %p36 = por %p34, %p35
      %p37 = scmp.ne.s32.totalorder %s29, %s32
      %p38 = scmp.eq.s32.totalorder %s19, 0
      %p39 = por %p37, %p38
      %p40 = scmp.ne.s32.totalorder %s29, %s32
      %p41 = scmp.eq.s32.totalorder %s24, 1
      %p42 = por %p40, %p41
      %p43 = scmp.ne.s32.totalorder %s32, %s33
      %p44 = scmp.eq.s32.totalorder %s24, 0
      %p45 = por %p43, %p44
      %p46 = scmp.ne.s32.totalorder %s32, %s33
      %p47 = scmp.eq.s32.totalorder %s25, 1
      %p48 = por %p46, %p47
      %p50 = scmp.ne.s32.totalorder %s33, %s49
      %p51 = scmp.eq.s32.totalorder %s25, 0
      %p52 = por %p50, %p51
      %s54 = sadd.s32 %s53, 1
      %p57 = scmp.eq.s32.totalorder %s19, 1
      %p58 = scmp.ne.s32.totalorder %s53, %s55
      %p59 = scmp.eq.s32.totalorder %s19, 0
      %p60 = por %p58, %p59
      %p61 = scmp.ne.s32.totalorder %s53, %s55
      %p62 = scmp.eq.s32.totalorder %s24, 1
      %p63 = por %p61, %p62
      %p64 = scmp.ne.s32.totalorder %s55, %s56
      %p65 = scmp.eq.s32.totalorder %s24, 0
      %p66 = por %p64, %p65
      %p67 = scmp.ne.s32.totalorder %s55, %s56
      %p68 = scmp.eq.s32.totalorder %s25, 1
      %p69 = por %p67, %p68
      %p71 = scmp.ne.s32.totalorder %s56, %s70
      %p72 = scmp.eq.s32.totalorder %s25, 0
      %p73 = por %p71, %p72
      %s75 = sadd.s32 %s74, 1
      %p78 = scmp.eq.s32.totalorder %s19, 1
      %p79 = scmp.ne.s32.totalorder %s74, %s76
      %p80 = scmp.eq.s32.totalorder %s19, 0
      %p81 = por %p79, %p80
      %p82 = scmp.ne.s32.totalorder %s74, %s76
      %p83 = scmp.eq.s32.totalorder %s24, 1
      %p84 = por %p82, %p83
      %p85 = scmp.ne.s32.totalorder %s76, %s77
      %p86 = scmp.eq.s32.totalorder %s24, 0
      %p87 = por %p85, %p86
      %p88 = scmp.ne.s32.totalorder %s76, %s77
      %p89 = scmp.eq.s32.totalorder %s25, 1
      %p90 = por %p88, %p89
      %p92 = scmp.ne.s32.totalorder %s77, %s91
      %p93 = scmp.eq.s32.totalorder %s25, 0
      %p94 = por %p92, %p93
      %s96 = sadd.s32 %s95, 1
      %p99 = scmp.eq.s32.totalorder %s19, 1
      %p100 = scmp.ne.s32.totalorder %s95, %s97
      %p101 = scmp.eq.s32.totalorder %s19, 0
      %p102 = por %p100, %p101
      %p103 = scmp.ne.s32.totalorder %s95, %s97
      %p104 = scmp.eq.s32.totalorder %s24, 1
      %p105 = por %p103, %p104
      %p106 = scmp.ne.s32.totalorder %s97, %s98
      %p107 = scmp.eq.s32.totalorder %s24, 0
      %p108 = por %p106, %p107
      %p109 = scmp.ne.s32.totalorder %s97, %s98
      %p110 = scmp.eq.s32.totalorder %s25, 1
      %p111 = por %p109, %p110
      %p113 = scmp.ne.s32.totalorder %s98, %s112
      %p114 = scmp.eq.s32.totalorder %s25, 0
      %p115 = por %p113, %p114
      %s117 = sadd.s32 %s116, 1
      %p120 = scmp.eq.s32.totalorder %s19, 1
      %p121 = scmp.ne.s32.totalorder %s116, %s118
      %p122 = scmp.eq.s32.totalorder %s19, 0
      %p123 = por %p121, %p122
      %p124 = scmp.ne.s32.totalorder %s116, %s118
      %p125 = scmp.eq.s32.totalorder %s24, 1
      %p126 = por %p124, %p125
      %p127 = scmp.ne.s32.totalorder %s118, %s119
      %p128 = scmp.eq.s32.totalorder %s24, 0
      %p129 = por %p127, %p128
      %p130 = scmp.ne.s32.totalorder %s118, %s119
      %p131 = scmp.eq.s32.totalorder %s25, 1
      %p132 = por %p130, %p131
      %p134 = scmp.ne.s32.totalorder %s119, %s133
      %p135 = scmp.eq.s32.totalorder %s25, 0
      %p136 = por %p134, %p135
      %s138 = sadd.s32 %s137, 1
      %p141 = scmp.eq.s32.totalorder %s19, 1
      %p142 = scmp.ne.s32.totalorder %s137, %s139
      %p143 = scmp.eq.s32.totalorder %s19, 0
      %p144 = por %p142, %p143
      %p145 = scmp.ne.s32.totalorder %s137, %s139
      %p146 = scmp.eq.s32.totalorder %s24, 1
      %p147 = por %p145, %p146
      %p148 = scmp.ne.s32.totalorder %s139, %s140
      %p149 = scmp.eq.s32.totalorder %s24, 0
      %p150 = por %p148, %p149
      %p151 = scmp.ne.s32.totalorder %s139, %s140
      %p152 = scmp.eq.s32.totalorder %s25, 1
      %p153 = por %p151, %p152
      %p155 = scmp.ne.s32.totalorder %s140, %s154
      %p156 = scmp.eq.s32.totalorder %s25, 0
      %p157 = por %p155, %p156
      %s158 = ssub.s32 %s19, %s26
      %p159 = scmp.eq.s32.totalorder %s158, 0
      %s161 = sadd.s32 %s160, 1
      %s162 = scalar_select %p159, %s160, %s161
      %p165 = pneg %p159
      %p166 = scmp.eq.s32.totalorder %s19, 1
      %p167 = por %p165, %p166
      %p168 = scmp.ne.s32.totalorder %s160, %s163
      %p169 = scmp.eq.s32.totalorder %s19, 0
      %p170 = por %p168, %p169
      %p171 = scmp.ne.s32.totalorder %s160, %s163
      %p172 = scmp.eq.s32.totalorder %s24, 1
      %p173 = por %p171, %p172
      %p174 = scmp.ne.s32.totalorder %s163, %s164
      %p175 = scmp.eq.s32.totalorder %s24, 0
      %p176 = por %p174, %p175
      %p177 = scmp.ne.s32.totalorder %s163, %s164
      %p178 = scmp.eq.s32.totalorder %s25, 1
      %p179 = por %p177, %p178
      %p181 = scmp.ne.s32.totalorder %s164, %s180
      %p182 = scmp.eq.s32.totalorder %s25, 0
      %p183 = por %p181, %p182
      %p184 = scmp.le.s32.totalorder 1, %s19
      %p185 = scmp.lt.s32.totalorder %s19, 3
      %p186 = pnand %p184, %p185
      %p187 = pneg %p186
      // Predicated region
      $region9: #{tpu_custom_call.1} parent=5 // pred_check
        _
      $region10: #{tpu_custom_call.1} parent=5 // pred_check_branch
        %189 = sbr.rel (%p186) target = $region12
      $region11: #{tpu_custom_call.1} parent=5 // pred_region
        %s190 = ssub.s32 %s19, 1
        // Predicated region
        $region13: #{tpu_custom_call.1} parent=11 // pred_check
          %p191 = pneg %p66
        $region14: #{tpu_custom_call.1} parent=11 // pred_check_branch
          %193 = sbr.rel (%p191) target = $region16
        $region15: #{tpu_custom_call.1} parent=11 // pred_region
          %s195 = ssub.s32 1152, 1152
          %196 = vsyncadd [#allocation8], %s195
          %s197 = sshll.u32 [#allocation7], 4
          %s198 = int_to_ptr.vmem [resolvable:$true] %s197
          %203 = dma.hbm_to_vmem [thread:$0]  %s1, 1152, %s198, [#allocation8], 64, 64, 4
        $region16: #{tpu_custom_call.1} parent=11 // pred_fallthru
          _
        // Predicated region
        $region17: #{tpu_custom_call.1} parent=11 // pred_check
          %p204 = pneg %p87
        $region18: #{tpu_custom_call.1} parent=11 // pred_check_branch
          %206 = sbr.rel (%p204) target = $region20
        $region19: #{tpu_custom_call.1} parent=11 // pred_region
          _
        $region20: #{tpu_custom_call.1} parent=11 // pred_fallthru
          _
        // Predicated region
        $region21: #{tpu_custom_call.1} parent=11 // pred_check
          %p207 = pneg %p108
        $region22: #{tpu_custom_call.1} parent=11 // pred_check_branch
          %209 = sbr.rel (%p207) target = $region24
        $region23: #{tpu_custom_call.1} parent=11 // pred_region
          %s211 = ssub.s32 1152, 1152
          %212 = vsyncadd [#allocation8], %s211
          %s213 = sshll.u32 [#allocation9], 4
          %s214 = int_to_ptr.vmem [resolvable:$true] %s213
          %219 = dma.hbm_to_vmem [thread:$0]  %s3, 1152, %s214, [#allocation8], 64, 64, 4
        $region24: #{tpu_custom_call.1} parent=11 // pred_fallthru
          _
        // Predicated region
        $region25: #{tpu_custom_call.1} parent=11 // pred_check
          %p220 = pneg %p129
        $region26: #{tpu_custom_call.1} parent=11 // pred_check_branch
          %222 = sbr.rel (%p220) target = $region28
        $region27: #{tpu_custom_call.1} parent=11 // pred_region
          _
        $region28: #{tpu_custom_call.1} parent=11 // pred_fallthru
          _
        // Predicated region
        $region29: #{tpu_custom_call.1} parent=11 // pred_check
          %p223 = pneg %p150
        $region30: #{tpu_custom_call.1} parent=11 // pred_check_branch
          %225 = sbr.rel (%p223) target = $region32
        $region31: #{tpu_custom_call.1} parent=11 // pred_region
          _
        $region32: #{tpu_custom_call.1} parent=11 // pred_fallthru
          _
      $region12: #{tpu_custom_call.1} parent=5 // pred_fallthru
        _
      %p226 = scmp.lt.s32.totalorder %s19, 2
      // Predicated region
      $region33: #{tpu_custom_call.1} parent=5 // pred_check
        %p227 = pneg %p226
      $region34: #{tpu_custom_call.1} parent=5 // pred_check_branch
        %229 = sbr.rel (%p227) target = $region36
      $region35: #{tpu_custom_call.1} parent=5 // pred_region
        // Predicated region
        $region37: #{tpu_custom_call.1} parent=35 // pred_check
          %p230 = pneg %p39
        $region38: #{tpu_custom_call.1} parent=35 // pred_check_branch
          %232 = sbr.rel (%p230) target = $region40
        $region39: #{tpu_custom_call.1} parent=35 // pred_region
          %s233 = sand.u32 %s29, 1
          %s234 = scalar_lea.sflag [#allocation5], %s233
          %s235 = sand.u32 %s29, 1
          %s236 = smul.addr %s235, 32
          %s237 = scalar_lea.vmem [#allocation4], %s236
          %s239 = ssub.s32 512, 512
          %240 = vsyncadd %s234, %s239
          %s241 = smul.addr %s19, 8
          %s242 = smul.addr %s241, 64
          %s243 = scalar_lea.hbm %s0, %s242
          %s244 = sshll.u32 %s237, 4
          %s245 = int_to_ptr.vmem [resolvable:$true] %s244
          %250 = dma.hbm_to_vmem [thread:$0]  %s243, 512, %s245, %s234, 256, 256, 16
        $region40: #{tpu_custom_call.1} parent=35 // pred_fallthru
          _
      $region36: #{tpu_custom_call.1} parent=5 // pred_fallthru
        _
      %p251 = scmp.le.s32.totalorder 1, %s19
      %p252 = scmp.lt.s32.totalorder %s19, 3
      %p253 = pnand %p251, %p252
      %p254 = pneg %p253
      // Predicated region
      $region41: #{tpu_custom_call.1} parent=5 // pred_check
        _
      $region42: #{tpu_custom_call.1} parent=5 // pred_check_branch
        %256 = sbr.rel (%p253) target = $region44
      $region43: #{tpu_custom_call.1} parent=5 // pred_region
        %s257 = ssub.s32 %s19, 1
        %s258 = sand.u32 %s32, 1
        %s259 = scalar_lea.sflag [#allocation5], %s258
        %s260 = sand.u32 %s32, 1
        %s261 = smul.addr %s260, 32
        %s262 = scalar_lea.vmem [#allocation4], %s261
        // Predicated region
        $region45: #{tpu_custom_call.1} parent=43 // pred_check
          %p263 = pneg %p45
        $region46: #{tpu_custom_call.1} parent=43 // pred_check_branch
          %265 = sbr.rel (%p263) target = $region48
        $region47: #{tpu_custom_call.1} parent=43 // pred_region
          %266 = dma.done %s259, 512
        $region48: #{tpu_custom_call.1} parent=43 // pred_fallthru
          _
        // Predicated region
        $region49: #{tpu_custom_call.1} parent=43 // pred_check
          %p267 = pneg %p66
        $region50: #{tpu_custom_call.1} parent=43 // pred_check_branch
          %269 = sbr.rel (%p267) target = $region52
        $region51: #{tpu_custom_call.1} parent=43 // pred_region
          %270 = dma.done [#allocation8], 1152
        $region52: #{tpu_custom_call.1} parent=43 // pred_fallthru
          _
        // Predicated region
        $region53: #{tpu_custom_call.1} parent=43 // pred_check
          %p271 = pneg %p108
        $region54: #{tpu_custom_call.1} parent=43 // pred_check_branch
          %273 = sbr.rel (%p271) target = $region56
        $region55: #{tpu_custom_call.1} parent=43 // pred_region
          %274 = dma.done [#allocation8], 1152
        $region56: #{tpu_custom_call.1} parent=43 // pred_fallthru
          _
        %s275 = sand.u32 %s32, 1
        %s276 = scalar_lea.sflag [#allocation5], %s275
        %s277 = sand.u32 %s32, 1
        %s278 = smul.addr %s277, 32
        %s279 = scalar_lea.vmem [#allocation4], %s278
        %p280 = pneg %p45
        %p281 = pneg %p42
        %p282 = pneg %p66
        %p283 = pneg %p63
        %p284 = pneg %p87
        %p285 = pneg %p84
        %p286 = pneg %p108
        %p287 = pneg %p105
        %p288 = pneg %p129
        %p289 = pneg %p126
        %p290 = pneg %p150
        %p291 = pneg %p147
        %p292 = pneg %p176
        %p293 = pneg %p173
        %s294 = sand.u32 %s163, 1
        %s295 = scalar_lea.sflag [#allocation6], %s294
        %s296 = sand.u32 %s163, 1
        %s297 = smul.addr %s296, 32
        %s298 = scalar_lea.vmem [#allocation10], %s297
        %p300 = scmp.eq.s32.totalorder %s24, 0
        // Predicated region
        $region57: #{tpu_custom_call.1} parent=43 // pred_check
          %p301 = pneg %p300
        $region58: #{tpu_custom_call.1} parent=43 // pred_check_branch
          %303 = sbr.rel (%p301) target = $region60
        $region59: #{tpu_custom_call.1} parent=43 // pred_region
          %304 = vst [vmem:[#allocation2] sm:$0xf] 0
          %305 = vst [vmem:[#allocation2 + $0x10] sm:$0xf] 0
          %306 = vst [vmem:[#allocation2 + $0xc] sm:$0xf] 0
          %307 = vst [vmem:[#allocation2 + $0x1c] sm:$0xf] 0
        $region60: #{tpu_custom_call.1} parent=43 // pred_fallthru
          _
        %v308 = vld [vmem:[%s5] ss:$2 sm:$0x3]
        %s309 = scalar_lea.vmem %s5, 1
        %v310 = vld [vmem:[%s309] ss:$2 sm:$0x3]
        %v311 = vld [vmem:[#allocation7] sm:$0xf]
        %v312 = vld [vmem:[#allocation7 + $0x4] sm:$0xf]
        %v313 = vld [vmem:[%s262] sm:$0xff]
        %v314 = vld [vmem:[%s262 + $0x8] sm:$0xf]
        %v315 = vld [vmem:[%s262 + $0x10] sm:$0xff]
        %v316 = vld [vmem:[%s262 + $0x18] sm:$0xf]
        %v319 = vunpack.c.l.b16 %v311
        %v320 = vunpack.c.l.b16 %v312
        %v321 = vpack.c.b16 %v320, %v319
        %v326 = vunpack.c.l.b16 %v313
        %v327 = vunpack.c.h.b16 %v313
        %v328 = vunpack.c.l.b16 %v314
        %v329 = vunpack.c.l.b16 %v315
        %v330 = vunpack.c.h.b16 %v315
        %v331 = vunpack.c.l.b16 %v316
        %v332 = vpack.c.b16 %v329, %v326
        %v333 = vpack.c.b16 %v330, %v327
        %v334 = vpack.c.b16 %v331, %v328
        %335 = vrot.lane.b32.xlu0 %v332, 17
        %v336 = vpop.permute.xlu0 %335
        %337 = vrot.lane.b32.xlu0 %v333, 17
        %v338 = vpop.permute.xlu0 %337
        %339 = vrot.lane.b32.xlu0 %v334, 17
        %v340 = vpop.permute.xlu0 %339
        %vm341 = vcmask 138240
        %v342 = vsel %vm341, %v336, %v338
        %v343 = vsel %vm341, %v338, %v340
        %vm346 = vcmask 130048
        %v348 = vsel %vm346, %v321, 0
        %350 = vmatprep.subr.bf16.mxu0 0
        %351 = vmatpush1.bf16.msra.mxu0 0
        %352 = vmatprep.subr.bf16.mxu0 0
        %353 = vmatpush1.bf16.msra.mxu0 0
        %354 = vmatprep.subr.bf16.mxu0 0
        %355 = vmatpush1.bf16.msra.mxu0 0
        %356 = vmatprep.subr.bf16.mxu0 0
        %357 = vmatpush1.bf16.msra.mxu0 0
        %358 = vmatprep.subr.bf16.mxu0 0
        %359 = vmatpush1.bf16.msra.mxu0 0
        %360 = vmatprep.subr.bf16.mxu0 0
        %361 = vmatpush1.bf16.msra.mxu0 0
        %362 = vmatprep.subr.bf16.mxu0 0
        %363 = vmatpush1.bf16.msra.mxu0 0
        %364 = vmatprep.subr.bf16.mxu0 %v343
        %365 = vmatpush1.bf16.msra.mxu0 %v342
        %366 = vmatprep.subr.bf16.mxu0 0
        %367 = vmatpush2.bf16.msra.mxu0 0
        %368 = vmatprep.subr.bf16.mxu0 0
        %369 = vmatpush2.bf16.msra.mxu0 0
        %370 = vmatprep.subr.bf16.mxu0 0
        %371 = vmatpush2.bf16.msra.mxu0 0
        %372 = vmatprep.subr.bf16.mxu0 0
        %373 = vmatpush2.bf16.msra.mxu0 0
        %374 = vmatprep.subr.bf16.mxu0 0
        %375 = vmatpush2.bf16.msra.mxu0 0
        %376 = vmatprep.subr.bf16.mxu0 0
        %377 = vmatpush2.bf16.msra.mxu0 0
        %378 = vmatprep.subr.bf16.mxu0 0
        %379 = vmatpush2.bf16.msra.mxu0 0
        %380 = vmatprep.subr.bf16.mxu0 0
        %381 = vmatpush2.bf16.msra.mxu0 0
        %382 = vmatprep.mubr.bf16.mxu0 0
        %383 = vmatmul.mubr.bf16.gmra.mxu0 %v348
        %v384 = vpop.f32.mrf.mxu0
        %v385 = vadd.f32 0.0, %v384
        %v386 = vpop.f32.mrf.mxu0
        %v387 = vadd.f32 0.0, %v386
        %v388 = vpop.f32.mrf.mxu0
        %v389 = vadd.f32 0.0, %v388
        %v390 = vpop.f32.mrf.mxu0
        %v391 = vadd.f32 0.0, %v390
        %392 = vdwg.mxu0
        %v394 = vlaneseq
        %v395 = vshrl.u32 %v394, 7
        %v396 = vsub.s32 0, %v395
        %v397 = vrot.slane %v308, %v396
        %v398 = vlaneseq
        %v399 = vshrl.u32 %v398, 7
        %v400 = vsub.s32 1, %v399
        %v401 = vrot.slane %v308, %v400
        %v404 = vmul.f32 %v385, %v397
        %v405 = vmul.f32 %v387, %v401
        %v406 = vmul.f32 %v389, %v397
        %v407 = vmul.f32 %v391, %v401
        %408 = vst [vmem:[#allocation3] sm:$0xff] %v404
        %409 = vst [vmem:[#allocation3 + $0x8] sm:$0xff] %v405
        %410 = vst [vmem:[#allocation3 + $0x10] sm:$0xff] %v406
        %411 = vst [vmem:[#allocation3 + $0x18] sm:$0xff] %v407
        %s412 = scalar_lea.vmem [#allocation7], 8
        %v413 = vld [vmem:[%s412] sm:$0xf]
        %v414 = vld [vmem:[%s412 + $0x4] sm:$0xf]
        %v415 = vld [vmem:[%s262] sm:$0xff]
        %v416 = vld [vmem:[%s262 + $0x8] sm:$0xf]
        %v417 = vld [vmem:[%s262 + $0x10] sm:$0xff]
        %v418 = vld [vmem:[%s262 + $0x18] sm:$0xf]
        %v421 = vunpack.c.l.b16 %v413
        %v422 = vunpack.c.l.b16 %v414
        %v423 = vpack.c.b16 %v422, %v421
        %v428 = vunpack.c.l.b16 %v415
        %v429 = vunpack.c.h.b16 %v415
        %v430 = vunpack.c.l.b16 %v416
        %v431 = vunpack.c.l.b16 %v417
        %v432 = vunpack.c.h.b16 %v417
        %v433 = vunpack.c.l.b16 %v418
        %v434 = vpack.c.b16 %v431, %v428
        %v435 = vpack.c.b16 %v432, %v429
        %v436 = vpack.c.b16 %v433, %v430
        %437 = vrot.lane.b32.xlu0 %v434, 16
        %v438 = vpop.permute.xlu0 %437
        %439 = vrot.lane.b32.xlu0 %v435, 16
        %v440 = vpop.permute.xlu0 %439
        %441 = vrot.lane.b32.xlu0 %v436, 16
        %v442 = vpop.permute.xlu0 %441
        %vm443 = vcmask 130048
        %v444 = vsel %vm443, %v438, %v440
        %v445 = vsel %vm443, %v440, %v442
        %v449 = vsel %vm346, %v423, 0
        %451 = vmatprep.subr.bf16.mxu0 0
        %452 = vmatpush1.bf16.msra.mxu0 0
        %453 = vmatprep.subr.bf16.mxu0 0
        %454 = vmatpush1.bf16.msra.mxu0 0
        %455 = vmatprep.subr.bf16.mxu0 0
        %456 = vmatpush1.bf16.msra.mxu0 0
        %457 = vmatprep.subr.bf16.mxu0 0
        %458 = vmatpush1.bf16.msra.mxu0 0
        %459 = vmatprep.subr.bf16.mxu0 0
        %460 = vmatpush1.bf16.msra.mxu0 0
        %461 = vmatprep.subr.bf16.mxu0 0
        %462 = vmatpush1.bf16.msra.mxu0 0
        %463 = vmatprep.subr.bf16.mxu0 0
        %464 = vmatpush1.bf16.msra.mxu0 0
        %465 = vmatprep.subr.bf16.mxu0 %v445
        %466 = vmatpush1.bf16.msra.mxu0 %v444
        %467 = vmatprep.subr.bf16.mxu0 0
        %468 = vmatpush2.bf16.msra.mxu0 0
        %469 = vmatprep.subr.bf16.mxu0 0
        %470 = vmatpush2.bf16.msra.mxu0 0
        %471 = vmatprep.subr.bf16.mxu0 0
        %472 = vmatpush2.bf16.msra.mxu0 0
        %473 = vmatprep.subr.bf16.mxu0 0
        %474 = vmatpush2.bf16.msra.mxu0 0
        %475 = vmatprep.subr.bf16.mxu0 0
        %476 = vmatpush2.bf16.msra.mxu0 0
        %477 = vmatprep.subr.bf16.mxu0 0
        %478 = vmatpush2.bf16.msra.mxu0 0
        %479 = vmatprep.subr.bf16.mxu0 0
        %480 = vmatpush2.bf16.msra.mxu0 0
        %481 = vmatprep.subr.bf16.mxu0 0
        %482 = vmatpush2.bf16.msra.mxu0 0
        %483 = vmatprep.mubr.bf16.mxu0 0
        %484 = vmatmul.mubr.bf16.gmra.mxu0 %v449
        %v485 = vpop.f32.mrf.mxu0
        %v486 = vadd.f32 0.0, %v485
        %v487 = vpop.f32.mrf.mxu0
        %v488 = vadd.f32 0.0, %v487
        %v489 = vpop.f32.mrf.mxu0
        %v490 = vadd.f32 0.0, %v489
        %v491 = vpop.f32.mrf.mxu0
        %v492 = vadd.f32 0.0, %v491
        %493 = vdwg.mxu0
        %v494 = vld [vmem:[#allocation3] sm:$0xff]
        %v495 = vld [vmem:[#allocation3 + $0x8] sm:$0xff]
        %v496 = vld [vmem:[#allocation3 + $0x10] sm:$0xff]
        %v497 = vld [vmem:[#allocation3 + $0x18] sm:$0xff]
        %v498 = vadd.f32 %v494, %v486
        %v499 = vadd.f32 %v495, %v488
        %v500 = vadd.f32 %v496, %v490
        %v501 = vadd.f32 %v497, %v492
        %502 = vst [vmem:[#allocation3] sm:$0xff] %v498
        %503 = vst [vmem:[#allocation3 + $0x8] sm:$0xff] %v499
        %504 = vst [vmem:[#allocation3 + $0x10] sm:$0xff] %v500
        %505 = vst [vmem:[#allocation3 + $0x18] sm:$0xff] %v501
        %s506 = scalar_lea.vmem [#allocation7], 16
        %v507 = vld [vmem:[%s506] sm:$0xf]
        %v508 = vld [vmem:[%s506 + $0x4] sm:$0xf]
        %v509 = vld [vmem:[%s262] sm:$0xff]
        %v510 = vld [vmem:[%s262 + $0x8] sm:$0xf]
        %v511 = vld [vmem:[%s262 + $0x10] sm:$0xff]
        %v512 = vld [vmem:[%s262 + $0x18] sm:$0xf]
        %v515 = vunpack.c.l.b16 %v507
        %v516 = vunpack.c.l.b16 %v508
        %v517 = vpack.c.b16 %v516, %v515
        %v522 = vunpack.c.l.b16 %v509
        %v523 = vunpack.c.h.b16 %v509
        %v524 = vunpack.c.l.b16 %v510
        %v525 = vunpack.c.l.b16 %v511
        %v526 = vunpack.c.h.b16 %v511
        %v527 = vunpack.c.l.b16 %v512
        %v528 = vpack.c.b16 %v525, %v522
        %v529 = vpack.c.b16 %v526, %v523
        %v530 = vpack.c.b16 %v527, %v524
        %531 = vrot.lane.b32.xlu0 %v528, 15
        %v532 = vpop.permute.xlu0 %531
        %533 = vrot.lane.b32.xlu0 %v529, 15
        %v534 = vpop.permute.xlu0 %533
        %535 = vrot.lane.b32.xlu0 %v530, 15
        %v536 = vpop.permute.xlu0 %535
        %vm537 = vcmask 121856
        %v538 = vsel %vm537, %v532, %v534
        %v539 = vsel %vm537, %v534, %v536
        %v543 = vsel %vm346, %v517, 0
        %545 = vmatprep.subr.bf16.mxu0 0
        %546 = vmatpush1.bf16.msra.mxu0 0
        %547 = vmatprep.subr.bf16.mxu0 0
        %548 = vmatpush1.bf16.msra.mxu0 0
        %549 = vmatprep.subr.bf16.mxu0 0
        %550 = vmatpush1.bf16.msra.mxu0 0
        %551 = vmatprep.subr.bf16.mxu0 0
        %552 = vmatpush1.bf16.msra.mxu0 0
        %553 = vmatprep.subr.bf16.mxu0 0
        %554 = vmatpush1.bf16.msra.mxu0 0
        %555 = vmatprep.subr.bf16.mxu0 0
        %556 = vmatpush1.bf16.msra.mxu0 0
        %557 = vmatprep.subr.bf16.mxu0 0
        %558 = vmatpush1.bf16.msra.mxu0 0
        %559 = vmatprep.subr.bf16.mxu0 %v539
        %560 = vmatpush1.bf16.msra.mxu0 %v538
        %561 = vmatprep.subr.bf16.mxu0 0
        %562 = vmatpush2.bf16.msra.mxu0 0
        %563 = vmatprep.subr.bf16.mxu0 0
        %564 = vmatpush2.bf16.msra.mxu0 0
        %565 = vmatprep.subr.bf16.mxu0 0
        %566 = vmatpush2.bf16.msra.mxu0 0
        %567 = vmatprep.subr.bf16.mxu0 0
        %568 = vmatpush2.bf16.msra.mxu0 0
        %569 = vmatprep.subr.bf16.mxu0 0
        %570 = vmatpush2.bf16.msra.mxu0 0
        %571 = vmatprep.subr.bf16.mxu0 0
        %572 = vmatpush2.bf16.msra.mxu0 0
        %573 = vmatprep.subr.bf16.mxu0 0
        %574 = vmatpush2.bf16.msra.mxu0 0
        %575 = vmatprep.subr.bf16.mxu0 0
        %576 = vmatpush2.bf16.msra.mxu0 0
        %577 = vmatprep.mubr.bf16.mxu0 0
        %578 = vmatmul.mubr.bf16.gmra.mxu0 %v543
        %v579 = vpop.f32.mrf.mxu0
        %v580 = vadd.f32 0.0, %v579
        %v581 = vpop.f32.mrf.mxu0
        %v582 = vadd.f32 0.0, %v581
        %v583 = vpop.f32.mrf.mxu0
        %v584 = vadd.f32 0.0, %v583
        %v585 = vpop.f32.mrf.mxu0
        %v586 = vadd.f32 0.0, %v585
        %587 = vdwg.mxu0
        %v589 = vlaneseq
        %v590 = vshrl.u32 %v589, 7
        %v591 = vsub.s32 0, %v590
        %v592 = vrot.slane %v310, %v591
        %v593 = vlaneseq
        %v594 = vshrl.u32 %v593, 7
        %v595 = vsub.s32 1, %v594
        %v596 = vrot.slane %v310, %v595
        %v599 = vmul.f32 %v580, %v592
        %v600 = vmul.f32 %v582, %v596
        %v601 = vmul.f32 %v584, %v592
        %v602 = vmul.f32 %v586, %v596
        %v603 = vld [vmem:[#allocation3] sm:$0xff]
        %v604 = vld [vmem:[#allocation3 + $0x8] sm:$0xff]
        %v605 = vld [vmem:[#allocation3 + $0x10] sm:$0xff]
        %v606 = vld [vmem:[#allocation3 + $0x18] sm:$0xff]
        %v607 = vadd.f32 %v603, %v599
        %v608 = vadd.f32 %v604, %v600
        %v609 = vadd.f32 %v605, %v601
        %v610 = vadd.f32 %v606, %v602
        %611 = vst [vmem:[#allocation3] sm:$0xff] %v607
        %612 = vst [vmem:[#allocation3 + $0x8] sm:$0xff] %v608
        %613 = vst [vmem:[#allocation3 + $0x10] sm:$0xff] %v609
        %614 = vst [vmem:[#allocation3 + $0x18] sm:$0xff] %v610
        %s615 = scalar_lea.vmem [#allocation7], 24
        %v616 = vld [vmem:[%s615] sm:$0xf]
        %v617 = vld [vmem:[%s615 + $0x4] sm:$0xf]
        %v618 = vld [vmem:[%s262] sm:$0xff]
        %v619 = vld [vmem:[%s262 + $0x8] sm:$0xf]
        %v620 = vld [vmem:[%s262 + $0x10] sm:$0xff]
        %v621 = vld [vmem:[%s262 + $0x18] sm:$0xf]
        %v624 = vunpack.c.l.b16 %v616
        %v625 = vunpack.c.l.b16 %v617
        %v626 = vpack.c.b16 %v625, %v624
        %v631 = vunpack.c.l.b16 %v618
        %v632 = vunpack.c.h.b16 %v618
        %v633 = vunpack.c.l.b16 %v619
        %v634 = vunpack.c.l.b16 %v620
        %v635 = vunpack.c.h.b16 %v620
        %v636 = vunpack.c.l.b16 %v621
        %v637 = vpack.c.b16 %v634, %v631
        %v638 = vpack.c.b16 %v635, %v632
        %v639 = vpack.c.b16 %v636, %v633
        %640 = vrot.lane.b32.xlu0 %v637, 1
        %v641 = vpop.permute.xlu0 %640
        %642 = vrot.lane.b32.xlu0 %v638, 1
        %v643 = vpop.permute.xlu0 %642
        %644 = vrot.lane.b32.xlu0 %v639, 1
        %v645 = vpop.permute.xlu0 %644
        %vm646 = vcmask 7168
        %v647 = vsel %vm646, %v641, %v643
        %v648 = vsel %vm646, %v643, %v645
        %v652 = vsel %vm346, %v626, 0
        %654 = vmatprep.subr.bf16.mxu0 0
        %655 = vmatpush1.bf16.msra.mxu0 0
        %656 = vmatprep.subr.bf16.mxu0 0
        %657 = vmatpush1.bf16.msra.mxu0 0
        %658 = vmatprep.subr.bf16.mxu0 0
        %659 = vmatpush1.bf16.msra.mxu0 0
        %660 = vmatprep.subr.bf16.mxu0 0
        %661 = vmatpush1.bf16.msra.mxu0 0
        %662 = vmatprep.subr.bf16.mxu0 0
        %663 = vmatpush1.bf16.msra.mxu0 0
        %664 = vmatprep.subr.bf16.mxu0 0
        %665 = vmatpush1.bf16.msra.mxu0 0
        %666 = vmatprep.subr.bf16.mxu0 0
        %667 = vmatpush1.bf16.msra.mxu0 0
        %668 = vmatprep.subr.bf16.mxu0 %v648
        %669 = vmatpush1.bf16.msra.mxu0 %v647
        %670 = vmatprep.subr.bf16.mxu0 0
        %671 = vmatpush2.bf16.msra.mxu0 0
        %672 = vmatprep.subr.bf16.mxu0 0
        %673 = vmatpush2.bf16.msra.mxu0 0
        %674 = vmatprep.subr.bf16.mxu0 0
        %675 = vmatpush2.bf16.msra.mxu0 0
        %676 = vmatprep.subr.bf16.mxu0 0
        %677 = vmatpush2.bf16.msra.mxu0 0
        %678 = vmatprep.subr.bf16.mxu0 0
        %679 = vmatpush2.bf16.msra.mxu0 0
        %680 = vmatprep.subr.bf16.mxu0 0
        %681 = vmatpush2.bf16.msra.mxu0 0
        %682 = vmatprep.subr.bf16.mxu0 0
        %683 = vmatpush2.bf16.msra.mxu0 0
        %684 = vmatprep.subr.bf16.mxu0 0
        %685 = vmatpush2.bf16.msra.mxu0 0
        %686 = vmatprep.mubr.bf16.mxu0 0
        %687 = vmatmul.mubr.bf16.gmra.mxu0 %v652
        %v688 = vpop.f32.mrf.mxu0
        %v689 = vadd.f32 0.0, %v688
        %v690 = vpop.f32.mrf.mxu0
        %v691 = vadd.f32 0.0, %v690
        %v692 = vpop.f32.mrf.mxu0
        %v693 = vadd.f32 0.0, %v692
        %v694 = vpop.f32.mrf.mxu0
        %v695 = vadd.f32 0.0, %v694
        %696 = vdwg.mxu0
        %v697 = vmul.f32 %v689, %v397
        %v698 = vmul.f32 %v691, %v401
        %v699 = vmul.f32 %v693, %v397
        %v700 = vmul.f32 %v695, %v401
        %v701 = vld [vmem:[#allocation3] sm:$0xff]
        %v702 = vld [vmem:[#allocation3 + $0x8] sm:$0xff]
        %v703 = vld [vmem:[#allocation3 + $0x10] sm:$0xff]
        %v704 = vld [vmem:[#allocation3 + $0x18] sm:$0xff]
        %v705 = vadd.f32 %v701, %v697
        %v706 = vadd.f32 %v702, %v698
        %v707 = vadd.f32 %v703, %v699
        %v708 = vadd.f32 %v704, %v700
        %709 = vst [vmem:[#allocation3] sm:$0xff] %v705
        %710 = vst [vmem:[#allocation3 + $0x8] sm:$0xff] %v706
        %711 = vst [vmem:[#allocation3 + $0x10] sm:$0xff] %v707
        %712 = vst [vmem:[#allocation3 + $0x18] sm:$0xff] %v708
        %s713 = scalar_lea.vmem [#allocation7], 32
        %v714 = vld [vmem:[%s713] sm:$0xf]
        %v715 = vld [vmem:[%s713 + $0x4] sm:$0xf]
        %v716 = vld [vmem:[%s262 + $0x4] sm:$0xff]
        %v717 = vld [vmem:[%s262 + $0x14] sm:$0xff]
        %v720 = vunpack.c.l.b16 %v714
        %v721 = vunpack.c.l.b16 %v715
        %v722 = vpack.c.b16 %v721, %v720
        %v725 = vunpack.c.l.b16 %v716
        %v726 = vunpack.c.h.b16 %v716
        %v727 = vunpack.c.l.b16 %v717
        %v728 = vunpack.c.h.b16 %v717
        %v729 = vpack.c.b16 %v727, %v725
        %v730 = vpack.c.b16 %v728, %v726
        %v734 = vsel %vm346, %v722, 0
        %736 = vmatprep.subr.bf16.mxu0 0
        %737 = vmatpush1.bf16.msra.mxu0 0
        %738 = vmatprep.subr.bf16.mxu0 0
        %739 = vmatpush1.bf16.msra.mxu0 0
        %740 = vmatprep.subr.bf16.mxu0 0
        %741 = vmatpush1.bf16.msra.mxu0 0
        %742 = vmatprep.subr.bf16.mxu0 0
        %743 = vmatpush1.bf16.msra.mxu0 0
        %744 = vmatprep.subr.bf16.mxu0 0
        %745 = vmatpush1.bf16.msra.mxu0 0
        %746 = vmatprep.subr.bf16.mxu0 0
        %747 = vmatpush1.bf16.msra.mxu0 0
        %748 = vmatprep.subr.bf16.mxu0 0
        %749 = vmatpush1.bf16.msra.mxu0 0
        %750 = vmatprep.subr.bf16.mxu0 %v730
        %751 = vmatpush1.bf16.msra.mxu0 %v729
        %752 = vmatprep.subr.bf16.mxu0 0
        %753 = vmatpush2.bf16.msra.mxu0 0
        %754 = vmatprep.subr.bf16.mxu0 0
        %755 = vmatpush2.bf16.msra.mxu0 0
        %756 = vmatprep.subr.bf16.mxu0 0
        %757 = vmatpush2.bf16.msra.mxu0 0
        %758 = vmatprep.subr.bf16.mxu0 0
        %759 = vmatpush2.bf16.msra.mxu0 0
        %760 = vmatprep.subr.bf16.mxu0 0
        %761 = vmatpush2.bf16.msra.mxu0 0
        %762 = vmatprep.subr.bf16.mxu0 0
        %763 = vmatpush2.bf16.msra.mxu0 0
        %764 = vmatprep.subr.bf16.mxu0 0
        %765 = vmatpush2.bf16.msra.mxu0 0
        %766 = vmatprep.subr.bf16.mxu0 0
        %767 = vmatpush2.bf16.msra.mxu0 0
        %768 = vmatprep.mubr.bf16.mxu0 0
        %769 = vmatmul.mubr.bf16.gmra.mxu0 %v734
        %v770 = vpop.f32.mrf.mxu0
        %v771 = vadd.f32 0.0, %v770
        %v772 = vpop.f32.mrf.mxu0
        %v773 = vadd.f32 0.0, %v772
        %v774 = vpop.f32.mrf.mxu0
        %v775 = vadd.f32 0.0, %v774
        %v776 = vpop.f32.mrf.mxu0
        %v777 = vadd.f32 0.0, %v776
        %778 = vdwg.mxu0
        %v779 = vld [vmem:[#allocation3] sm:$0xff]
        %v780 = vld [vmem:[#allocation3 + $0x8] sm:$0xff]
        %v781 = vld [vmem:[#allocation3 + $0x10] sm:$0xff]
        %v782 = vld [vmem:[#allocation3 + $0x18] sm:$0xff]
        %v783 = vadd.f32 %v779, %v771
        %v784 = vadd.f32 %v780, %v773
        %v785 = vadd.f32 %v781, %v775
        %v786 = vadd.f32 %v782, %v777
        %787 = vst [vmem:[#allocation3] sm:$0xff] %v783
        %788 = vst [vmem:[#allocation3 + $0x8] sm:$0xff] %v784
        %789 = vst [vmem:[#allocation3 + $0x10] sm:$0xff] %v785
        %790 = vst [vmem:[#allocation3 + $0x18] sm:$0xff] %v786
        %s791 = scalar_lea.vmem [#allocation7], 40
        %v792 = vld [vmem:[%s791] sm:$0xf]
        %v793 = vld [vmem:[%s791 + $0x4] sm:$0xf]
        %v794 = vld [vmem:[%s262 + $0x4] sm:$0xff]
        %v795 = vld [vmem:[%s262 + $0xc] sm:$0xf]
        %v796 = vld [vmem:[%s262 + $0x14] sm:$0xff]
        %v797 = vld [vmem:[%s262 + $0x1c] sm:$0xf]
        %v800 = vunpack.c.l.b16 %v792
        %v801 = vunpack.c.l.b16 %v793
        %v802 = vpack.c.b16 %v801, %v800
        %v807 = vunpack.c.l.b16 %v794
        %v808 = vunpack.c.h.b16 %v794
        %v809 = vunpack.c.l.b16 %v795
        %v810 = vunpack.c.l.b16 %v796
        %v811 = vunpack.c.h.b16 %v796
        %v812 = vunpack.c.l.b16 %v797
        %v813 = vpack.c.b16 %v810, %v807
        %v814 = vpack.c.b16 %v811, %v808
        %v815 = vpack.c.b16 %v812, %v809
        %816 = vrot.lane.b32.xlu0 %v813, 127
        %v817 = vpop.permute.xlu0 %816
        %818 = vrot.lane.b32.xlu0 %v814, 127
        %v819 = vpop.permute.xlu0 %818
        %820 = vrot.lane.b32.xlu0 %v815, 127
        %v821 = vpop.permute.xlu0 %820
        %vm822 = vcmask 1039360
        %v823 = vsel %vm822, %v817, %v819
        %v824 = vsel %vm822, %v819, %v821
        %v828 = vsel %vm346, %v802, 0
        %830 = vmatprep.subr.bf16.mxu0 0
        %831 = vmatpush1.bf16.msra.mxu0 0
        %832 = vmatprep.subr.bf16.mxu0 0
        %833 = vmatpush1.bf16.msra.mxu0 0
        %834 = vmatprep.subr.bf16.mxu0 0
        %835 = vmatpush1.bf16.msra.mxu0 0
        %836 = vmatprep.subr.bf16.mxu0 0
        %837 = vmatpush1.bf16.msra.mxu0 0
        %838 = vmatprep.subr.bf16.mxu0 0
        %839 = vmatpush1.bf16.msra.mxu0 0
        %840 = vmatprep.subr.bf16.mxu0 0
        %841 = vmatpush1.bf16.msra.mxu0 0
        %842 = vmatprep.subr.bf16.mxu0 0
        %843 = vmatpush1.bf16.msra.mxu0 0
        %844 = vmatprep.subr.bf16.mxu0 %v824
        %845 = vmatpush1.bf16.msra.mxu0 %v823
        %846 = vmatprep.subr.bf16.mxu0 0
        %847 = vmatpush2.bf16.msra.mxu0 0
        %848 = vmatprep.subr.bf16.mxu0 0
        %849 = vmatpush2.bf16.msra.mxu0 0
        %850 = vmatprep.subr.bf16.mxu0 0
        %851 = vmatpush2.bf16.msra.mxu0 0
        %852 = vmatprep.subr.bf16.mxu0 0
        %853 = vmatpush2.bf16.msra.mxu0 0
        %854 = vmatprep.subr.bf16.mxu0 0
        %855 = vmatpush2.bf16.msra.mxu0 0
        %856 = vmatprep.subr.bf16.mxu0 0
        %857 = vmatpush2.bf16.msra.mxu0 0
        %858 = vmatprep.subr.bf16.mxu0 0
        %859 = vmatpush2.bf16.msra.mxu0 0
        %860 = vmatprep.subr.bf16.mxu0 0
        %861 = vmatpush2.bf16.msra.mxu0 0
        %862 = vmatprep.mubr.bf16.mxu0 0
        %863 = vmatmul.mubr.bf16.gmra.mxu0 %v828
        %v864 = vpop.f32.mrf.mxu0
        %v865 = vadd.f32 0.0, %v864
        %v866 = vpop.f32.mrf.mxu0
        %v867 = vadd.f32 0.0, %v866
        %v868 = vpop.f32.mrf.mxu0
        %v869 = vadd.f32 0.0, %v868
        %v870 = vpop.f32.mrf.mxu0
        %v871 = vadd.f32 0.0, %v870
        %872 = vdwg.mxu0
        %v873 = vmul.f32 %v865, %v592
        %v874 = vmul.f32 %v867, %v596
        %v875 = vmul.f32 %v869, %v592
        %v876 = vmul.f32 %v871, %v596
        %v877 = vld [vmem:[#allocation3] sm:$0xff]
        %v878 = vld [vmem:[#allocation3 + $0x8] sm:$0xff]
        %v879 = vld [vmem:[#allocation3 + $0x10] sm:$0xff]
        %v880 = vld [vmem:[#allocation3 + $0x18] sm:$0xff]
        %v881 = vadd.f32 %v877, %v873
        %v882 = vadd.f32 %v878, %v874
        %v883 = vadd.f32 %v879, %v875
        %v884 = vadd.f32 %v880, %v876
        %885 = vst [vmem:[#allocation3] sm:$0xff] %v881
        %886 = vst [vmem:[#allocation3 + $0x8] sm:$0xff] %v882
        %887 = vst [vmem:[#allocation3 + $0x10] sm:$0xff] %v883
        %888 = vst [vmem:[#allocation3 + $0x18] sm:$0xff] %v884
        %s889 = scalar_lea.vmem [#allocation7], 48
        %v890 = vld [vmem:[%s889] sm:$0xf]
        %v891 = vld [vmem:[%s889 + $0x4] sm:$0xf]
        %v892 = vld [vmem:[%s262 + $0x4] sm:$0xff]
        %v893 = vld [vmem:[%s262 + $0xc] sm:$0xf]
        %v894 = vld [vmem:[%s262 + $0x14] sm:$0xff]
        %v895 = vld [vmem:[%s262 + $0x1c] sm:$0xf]
        %v898 = vunpack.c.l.b16 %v890
        %v899 = vunpack.c.l.b16 %v891
        %v900 = vpack.c.b16 %v899, %v898
        %v905 = vunpack.c.l.b16 %v892
        %v906 = vunpack.c.h.b16 %v892
        %v907 = vunpack.c.l.b16 %v893
        %v908 = vunpack.c.l.b16 %v894
        %v909 = vunpack.c.h.b16 %v894
        %v910 = vunpack.c.l.b16 %v895
        %v911 = vpack.c.b16 %v908, %v905
        %v912 = vpack.c.b16 %v909, %v906
        %v913 = vpack.c.b16 %v910, %v907
        %914 = vrot.lane.b32.xlu0 %v911, 113
        %v915 = vpop.permute.xlu0 %914
        %916 = vrot.lane.b32.xlu0 %v912, 113
        %v917 = vpop.permute.xlu0 %916
        %918 = vrot.lane.b32.xlu0 %v913, 113
        %v919 = vpop.permute.xlu0 %918
        %vm920 = vcmask 924672
        %v921 = vsel %vm920, %v915, %v917
        %v922 = vsel %vm920, %v917, %v919
        %v926 = vsel %vm346, %v900, 0
        %928 = vmatprep.subr.bf16.mxu0 0
        %929 = vmatpush1.bf16.msra.mxu0 0
        %930 = vmatprep.subr.bf16.mxu0 0
        %931 = vmatpush1.bf16.msra.mxu0 0
        %932 = vmatprep.subr.bf16.mxu0 0
        %933 = vmatpush1.bf16.msra.mxu0 0
        %934 = vmatprep.subr.bf16.mxu0 0
        %935 = vmatpush1.bf16.msra.mxu0 0
        %936 = vmatprep.subr.bf16.mxu0 0
        %937 = vmatpush1.bf16.msra.mxu0 0
        %938 = vmatprep.subr.bf16.mxu0 0
        %939 = vmatpush1.bf16.msra.mxu0 0
        %940 = vmatprep.subr.bf16.mxu0 0
        %941 = vmatpush1.bf16.msra.mxu0 0
        %942 = vmatprep.subr.bf16.mxu0 %v922
        %943 = vmatpush1.bf16.msra.mxu0 %v921
        %944 = vmatprep.subr.bf16.mxu0 0
        %945 = vmatpush2.bf16.msra.mxu0 0
        %946 = vmatprep.subr.bf16.mxu0 0
        %947 = vmatpush2.bf16.msra.mxu0 0
        %948 = vmatprep.subr.bf16.mxu0 0
        %949 = vmatpush2.bf16.msra.mxu0 0
        %950 = vmatprep.subr.bf16.mxu0 0
        %951 = vmatpush2.bf16.msra.mxu0 0
        %952 = vmatprep.subr.bf16.mxu0 0
        %953 = vmatpush2.bf16.msra.mxu0 0
        %954 = vmatprep.subr.bf16.mxu0 0
        %955 = vmatpush2.bf16.msra.mxu0 0
        %956 = vmatprep.subr.bf16.mxu0 0
        %957 = vmatpush2.bf16.msra.mxu0 0
        %958 = vmatprep.subr.bf16.mxu0 0
        %959 = vmatpush2.bf16.msra.mxu0 0
        %960 = vmatprep.mubr.bf16.mxu0 0
        %961 = vmatmul.mubr.bf16.gmra.mxu0 %v926
        %v962 = vpop.f32.mrf.mxu0
        %v963 = vadd.f32 0.0, %v962
        %v964 = vpop.f32.mrf.mxu0
        %v965 = vadd.f32 0.0, %v964
        %v966 = vpop.f32.mrf.mxu0
        %v967 = vadd.f32 0.0, %v966
        %v968 = vpop.f32.mrf.mxu0
        %v969 = vadd.f32 0.0, %v968
        %970 = vdwg.mxu0
        %v971 = vmul.f32 %v963, %v397
        %v972 = vmul.f32 %v965, %v401
        %v973 = vmul.f32 %v967, %v397
        %v974 = vmul.f32 %v969, %v401
        %v975 = vld [vmem:[#allocation3] sm:$0xff]
        %v976 = vld [vmem:[#allocation3 + $0x8] sm:$0xff]
        %v977 = vld [vmem:[#allocation3 + $0x10] sm:$0xff]
        %v978 = vld [vmem:[#allocation3 + $0x18] sm:$0xff]
        %v979 = vadd.f32 %v975, %v971
        %v980 = vadd.f32 %v976, %v972
        %v981 = vadd.f32 %v977, %v973
        %v982 = vadd.f32 %v978, %v974
        %983 = vst [vmem:[#allocation3] sm:$0xff] %v979
        %984 = vst [vmem:[#allocation3 + $0x8] sm:$0xff] %v980
        %985 = vst [vmem:[#allocation3 + $0x10] sm:$0xff] %v981
        %986 = vst [vmem:[#allocation3 + $0x18] sm:$0xff] %v982
        %s987 = scalar_lea.vmem [#allocation7], 56
        %v988 = vld [vmem:[%s987] sm:$0xf]
        %v989 = vld [vmem:[%s987 + $0x4] sm:$0xf]
        %v990 = vld [vmem:[%s262 + $0x4] sm:$0xff]
        %v991 = vld [vmem:[%s262 + $0xc] sm:$0xf]
        %v992 = vld [vmem:[%s262 + $0x14] sm:$0xff]
        %v993 = vld [vmem:[%s262 + $0x1c] sm:$0xf]
        %v996 = vunpack.c.l.b16 %v988
        %v997 = vunpack.c.l.b16 %v989
        %v998 = vpack.c.b16 %v997, %v996
        %v1003 = vunpack.c.l.b16 %v990
        %v1004 = vunpack.c.h.b16 %v990
        %v1005 = vunpack.c.l.b16 %v991
        %v1006 = vunpack.c.l.b16 %v992
        %v1007 = vunpack.c.h.b16 %v992
        %v1008 = vunpack.c.l.b16 %v993
        %v1009 = vpack.c.b16 %v1006, %v1003
        %v1010 = vpack.c.b16 %v1007, %v1004
        %v1011 = vpack.c.b16 %v1008, %v1005
        %1012 = vrot.lane.b32.xlu0 %v1009, 112
        %v1013 = vpop.permute.xlu0 %1012
        %1014 = vrot.lane.b32.xlu0 %v1010, 112
        %v1015 = vpop.permute.xlu0 %1014
        %1016 = vrot.lane.b32.xlu0 %v1011, 112
        %v1017 = vpop.permute.xlu0 %1016
        %vm1018 = vcmask 916480
        %v1019 = vsel %vm1018, %v1013, %v1015
        %v1020 = vsel %vm1018, %v1015, %v1017
        %v1024 = vsel %vm346, %v998, 0
        %1026 = vmatprep.subr.bf16.mxu0 0
        %1027 = vmatpush1.bf16.msra.mxu0 0
        %1028 = vmatprep.subr.bf16.mxu0 0
        %1029 = vmatpush1.bf16.msra.mxu0 0
        %1030 = vmatprep.subr.bf16.mxu0 0
        %1031 = vmatpush1.bf16.msra.mxu0 0
        %1032 = vmatprep.subr.bf16.mxu0 0
        %1033 = vmatpush1.bf16.msra.mxu0 0
        %1034 = vmatprep.subr.bf16.mxu0 0
        %1035 = vmatpush1.bf16.msra.mxu0 0
        %1036 = vmatprep.subr.bf16.mxu0 0
        %1037 = vmatpush1.bf16.msra.mxu0 0
        %1038 = vmatprep.subr.bf16.mxu0 0
        %1039 = vmatpush1.bf16.msra.mxu0 0
        %1040 = vmatprep.subr.bf16.mxu0 %v1020
        %1041 = vmatpush1.bf16.msra.mxu0 %v1019
        %1042 = vmatprep.subr.bf16.mxu0 0
        %1043 = vmatpush2.bf16.msra.mxu0 0
        %1044 = vmatprep.subr.bf16.mxu0 0
        %1045 = vmatpush2.bf16.msra.mxu0 0
        %1046 = vmatprep.subr.bf16.mxu0 0
        %1047 = vmatpush2.bf16.msra.mxu0 0
        %1048 = vmatprep.subr.bf16.mxu0 0
        %1049 = vmatpush2.bf16.msra.mxu0 0
        %1050 = vmatprep.subr.bf16.mxu0 0
        %1051 = vmatpush2.bf16.msra.mxu0 0
        %1052 = vmatprep.subr.bf16.mxu0 0
        %1053 = vmatpush2.bf16.msra.mxu0 0
        %1054 = vmatprep.subr.bf16.mxu0 0
        %1055 = vmatpush2.bf16.msra.mxu0 0
        %1056 = vmatprep.subr.bf16.mxu0 0
        %1057 = vmatpush2.bf16.msra.mxu0 0
        %1058 = vmatprep.mubr.bf16.mxu0 0
        %1059 = vmatmul.mubr.bf16.gmra.mxu0 %v1024
        %v1060 = vpop.f32.mrf.mxu0
        %v1061 = vadd.f32 0.0, %v1060
        %v1062 = vpop.f32.mrf.mxu0
        %v1063 = vadd.f32 0.0, %v1062
        %v1064 = vpop.f32.mrf.mxu0
        %v1065 = vadd.f32 0.0, %v1064
        %v1066 = vpop.f32.mrf.mxu0
        %v1067 = vadd.f32 0.0, %v1066
        %1068 = vdwg.mxu0
        %v1069 = vld [vmem:[#allocation3] sm:$0xff]
        %v1070 = vld [vmem:[#allocation3 + $0x8] sm:$0xff]
        %v1071 = vld [vmem:[#allocation3 + $0x10] sm:$0xff]
        %v1072 = vld [vmem:[#allocation3 + $0x18] sm:$0xff]
        %v1073 = vadd.f32 %v1069, %v1061
        %v1074 = vadd.f32 %v1070, %v1063
        %v1075 = vadd.f32 %v1071, %v1065
        %v1076 = vadd.f32 %v1072, %v1067
        %1077 = vst [vmem:[#allocation3] sm:$0xff] %v1073
        %1078 = vst [vmem:[#allocation3 + $0x8] sm:$0xff] %v1074
        %1079 = vst [vmem:[#allocation3 + $0x10] sm:$0xff] %v1075
        %1080 = vst [vmem:[#allocation3 + $0x18] sm:$0xff] %v1076
        %s1081 = scalar_lea.vmem [#allocation7], 64
        %v1082 = vld [vmem:[%s1081] sm:$0xf]
        %v1083 = vld [vmem:[%s1081 + $0x4] sm:$0xf]
        %v1084 = vld [vmem:[%s262 + $0x4] sm:$0xff]
        %v1085 = vld [vmem:[%s262 + $0xc] sm:$0xf]
        %v1086 = vld [vmem:[%s262 + $0x14] sm:$0xff]
        %v1087 = vld [vmem:[%s262 + $0x1c] sm:$0xf]
        %v1090 = vunpack.c.l.b16 %v1082
        %v1091 = vunpack.c.l.b16 %v1083
        %v1092 = vpack.c.b16 %v1091, %v1090
        %v1097 = vunpack.c.l.b16 %v1084
        %v1098 = vunpack.c.h.b16 %v1084
        %v1099 = vunpack.c.l.b16 %v1085
        %v1100 = vunpack.c.l.b16 %v1086
        %v1101 = vunpack.c.h.b16 %v1086
        %v1102 = vunpack.c.l.b16 %v1087
        %v1103 = vpack.c.b16 %v1100, %v1097
        %v1104 = vpack.c.b16 %v1101, %v1098
        %v1105 = vpack.c.b16 %v1102, %v1099
        %1106 = vrot.lane.b32.xlu0 %v1103, 111
        %v1107 = vpop.permute.xlu0 %1106
        %1108 = vrot.lane.b32.xlu0 %v1104, 111
        %v1109 = vpop.permute.xlu0 %1108
        %1110 = vrot.lane.b32.xlu0 %v1105, 111
        %v1111 = vpop.permute.xlu0 %1110
        %vm1112 = vcmask 908288
        %v1113 = vsel %vm1112, %v1107, %v1109
        %v1114 = vsel %vm1112, %v1109, %v1111
        %v1118 = vsel %vm346, %v1092, 0
        %1120 = vmatprep.subr.bf16.mxu0 0
        %1121 = vmatpush1.bf16.msra.mxu0 0
        %1122 = vmatprep.subr.bf16.mxu0 0
        %1123 = vmatpush1.bf16.msra.mxu0 0
        %1124 = vmatprep.subr.bf16.mxu0 0
        %1125 = vmatpush1.bf16.msra.mxu0 0
        %1126 = vmatprep.subr.bf16.mxu0 0
        %1127 = vmatpush1.bf16.msra.mxu0 0
        %1128 = vmatprep.subr.bf16.mxu0 0
        %1129 = vmatpush1.bf16.msra.mxu0 0
        %1130 = vmatprep.subr.bf16.mxu0 0
        %1131 = vmatpush1.bf16.msra.mxu0 0
        %1132 = vmatprep.subr.bf16.mxu0 0
        %1133 = vmatpush1.bf16.msra.mxu0 0
        %1134 = vmatprep.subr.bf16.mxu0 %v1114
        %1135 = vmatpush1.bf16.msra.mxu0 %v1113
        %1136 = vmatprep.subr.bf16.mxu0 0
        %1137 = vmatpush2.bf16.msra.mxu0 0
        %1138 = vmatprep.subr.bf16.mxu0 0
        %1139 = vmatpush2.bf16.msra.mxu0 0
        %1140 = vmatprep.subr.bf16.mxu0 0
        %1141 = vmatpush2.bf16.msra.mxu0 0
        %1142 = vmatprep.subr.bf16.mxu0 0
        %1143 = vmatpush2.bf16.msra.mxu0 0
        %1144 = vmatprep.subr.bf16.mxu0 0
        %1145 = vmatpush2.bf16.msra.mxu0 0
        %1146 = vmatprep.subr.bf16.mxu0 0
        %1147 = vmatpush2.bf16.msra.mxu0 0
        %1148 = vmatprep.subr.bf16.mxu0 0
        %1149 = vmatpush2.bf16.msra.mxu0 0
        %1150 = vmatprep.subr.bf16.mxu0 0
        %1151 = vmatpush2.bf16.msra.mxu0 0
        %1152 = vmatprep.mubr.bf16.mxu0 0
        %1153 = vmatmul.mubr.bf16.gmra.mxu0 %v1118
        %v1154 = vpop.f32.mrf.mxu0
        %v1155 = vadd.f32 0.0, %v1154
        %v1156 = vpop.f32.mrf.mxu0
        %v1157 = vadd.f32 0.0, %v1156
        %v1158 = vpop.f32.mrf.mxu0
        %v1159 = vadd.f32 0.0, %v1158
        %v1160 = vpop.f32.mrf.mxu0
        %v1161 = vadd.f32 0.0, %v1160
        %1162 = vdwg.mxu0
        %v1163 = vmul.f32 %v1155, %v592
        %v1164 = vmul.f32 %v1157, %v596
        %v1165 = vmul.f32 %v1159, %v592
        %v1166 = vmul.f32 %v1161, %v596
        %v1167 = vld [vmem:[#allocation3] sm:$0xff]
        %v1168 = vld [vmem:[#allocation3 + $0x8] sm:$0xff]
        %v1169 = vld [vmem:[#allocation3 + $0x10] sm:$0xff]
        %v1170 = vld [vmem:[#allocation3 + $0x18] sm:$0xff]
        %v1171 = vadd.f32 %v1167, %v1163
        %v1172 = vadd.f32 %v1168, %v1164
        %v1173 = vadd.f32 %v1169, %v1165
        %v1174 = vadd.f32 %v1170, %v1166
        %1175 = vst [vmem:[#allocation3] sm:$0xff] %v1171
        %1176 = vst [vmem:[#allocation3 + $0x8] sm:$0xff] %v1172
        %1177 = vst [vmem:[#allocation3 + $0x10] sm:$0xff] %v1173
        %1178 = vst [vmem:[#allocation3 + $0x18] sm:$0xff] %v1174
        %v1179 = vld [vmem:[#allocation3] sm:$0xff]
        %v1180 = vld [vmem:[#allocation3 + $0x8] sm:$0xff]
        %v1181 = vld [vmem:[#allocation3 + $0x10] sm:$0xff]
        %v1182 = vld [vmem:[#allocation3 + $0x18] sm:$0xff]
        %v1183 = vld [vmem:[%s2] sm:$0xff]
        %v1184 = vld [vmem:[%s2 + $0x8] sm:$0xff]
        %1186 = vset.pattern.permute.xlu0 0
        %1187 = vperm.xlu0 %1186, %v1183
        %v1188 = vpop.permute.xlu0 %1187
        %1191 = vset.pattern.permute.xlu0 0
        %1192 = vperm.xlu0 %1191, %v1184
        %v1193 = vpop.permute.xlu0 %1192
        %v1195 = vadd.f32 %v1179, %v1188
        %v1196 = vadd.f32 %v1180, %v1188
        %v1197 = vadd.f32 %v1181, %v1193
        %v1198 = vadd.f32 %v1182, %v1193
        %v1199 = vmax.f32 %v1195, 0.0
        %v1200 = vmax.f32 %v1196, 0.0
        %v1201 = vmax.f32 %v1197, 0.0
        %v1202 = vmax.f32 %v1198, 0.0
        %v1203 = vpack.c.bf16 %v1201, %v1199
        %v1204 = vpack.c.bf16 %v1202, %v1200
        %v1207 = vunpack.c.l.b16 %v1203
        %v1208 = vunpack.c.l.b16 %v1204
        %v1209 = vunpack.c.h.b16 %v1203
        %v1210 = vunpack.c.h.b16 %v1204
        %v1211 = vpack.c.b16 %v1208, %v1207
        %v1212 = vpack.c.b16 %v1210, %v1209
        %1215 = vst [vmem:[#allocation2 + $0x4] sm:$0xff] %v1211
        %1216 = vst [vmem:[#allocation2 + $0x14] sm:$0xff] %v1212
        %v1217 = vld [vmem:[#allocation9] sm:$0xf]
        %v1218 = vld [vmem:[#allocation9 + $0x4] sm:$0xf]
        %v1219 = vld [vmem:[#allocation2] sm:$0xff]
        %v1220 = vld [vmem:[#allocation2 + $0x8] sm:$0xf]
        %v1221 = vld [vmem:[#allocation2 + $0x10] sm:$0xff]
        %v1222 = vld [vmem:[#allocation2 + $0x18] sm:$0xf]
        %v1225 = vunpack.c.l.b16 %v1217
        %v1226 = vunpack.c.l.b16 %v1218
        %v1227 = vpack.c.b16 %v1226, %v1225
        %v1232 = vunpack.c.l.b16 %v1219
        %v1233 = vunpack.c.h.b16 %v1219
        %v1234 = vunpack.c.l.b16 %v1220
        %v1235 = vunpack.c.l.b16 %v1221
        %v1236 = vunpack.c.h.b16 %v1221
        %v1237 = vunpack.c.l.b16 %v1222
        %v1238 = vpack.c.b16 %v1235, %v1232
        %v1239 = vpack.c.b16 %v1236, %v1233
        %v1240 = vpack.c.b16 %v1237, %v1234
        %1241 = vrot.lane.b32.xlu0 %v1238, 17
        %v1242 = vpop.permute.xlu0 %1241
        %1243 = vrot.lane.b32.xlu0 %v1239, 17
        %v1244 = vpop.permute.xlu0 %1243
        %1245 = vrot.lane.b32.xlu0 %v1240, 17
        %v1246 = vpop.permute.xlu0 %1245
        %v1247 = vsel %vm341, %v1242, %v1244
        %v1248 = vsel %vm341, %v1244, %v1246
        %v1252 = vsel %vm346, %v1227, 0
        %1254 = vmatprep.subr.bf16.mxu0 0
        %1255 = vmatpush1.bf16.msra.mxu0 0
        %1256 = vmatprep.subr.bf16.mxu0 0
        %1257 = vmatpush1.bf16.msra.mxu0 0
        %1258 = vmatprep.subr.bf16.mxu0 0
        %1259 = vmatpush1.bf16.msra.mxu0 0
        %1260 = vmatprep.subr.bf16.mxu0 0
        %1261 = vmatpush1.bf16.msra.mxu0 0
        %1262 = vmatprep.subr.bf16.mxu0 0
        %1263 = vmatpush1.bf16.msra.mxu0 0
        %1264 = vmatprep.subr.bf16.mxu0 0
        %1265 = vmatpush1.bf16.msra.mxu0 0
        %1266 = vmatprep.subr.bf16.mxu0 0
        %1267 = vmatpush1.bf16.msra.mxu0 0
        %1268 = vmatprep.subr.bf16.mxu0 %v1248
        %1269 = vmatpush1.bf16.msra.mxu0 %v1247
        %1270 = vmatprep.subr.bf16.mxu0 0
        %1271 = vmatpush2.bf16.msra.mxu0 0
        %1272 = vmatprep.subr.bf16.mxu0 0
        %1273 = vmatpush2.bf16.msra.mxu0 0
        %1274 = vmatprep.subr.bf16.mxu0 0
        %1275 = vmatpush2.bf16.msra.mxu0 0
        %1276 = vmatprep.subr.bf16.mxu0 0
        %1277 = vmatpush2.bf16.msra.mxu0 0
        %1278 = vmatprep.subr.bf16.mxu0 0
        %1279 = vmatpush2.bf16.msra.mxu0 0
        %1280 = vmatprep.subr.bf16.mxu0 0
        %1281 = vmatpush2.bf16.msra.mxu0 0
        %1282 = vmatprep.subr.bf16.mxu0 0
        %1283 = vmatpush2.bf16.msra.mxu0 0
        %1284 = vmatprep.subr.bf16.mxu0 0
        %1285 = vmatpush2.bf16.msra.mxu0 0
        %1286 = vmatprep.mubr.bf16.mxu0 0
        %1287 = vmatmul.mubr.bf16.gmra.mxu0 %v1252
        %v1288 = vpop.f32.mrf.mxu0
        %v1289 = vadd.f32 0.0, %v1288
        %v1290 = vpop.f32.mrf.mxu0
        %v1291 = vadd.f32 0.0, %v1290
        %v1292 = vpop.f32.mrf.mxu0
        %v1293 = vadd.f32 0.0, %v1292
        %v1294 = vpop.f32.mrf.mxu0
        %v1295 = vadd.f32 0.0, %v1294
        %1296 = vdwg.mxu0
        %v1297 = vmul.f32 %v1289, %v397
        %v1298 = vmul.f32 %v1291, %v401
        %v1299 = vmul.f32 %v1293, %v397
        %v1300 = vmul.f32 %v1295, %v401
        %1301 = vst [vmem:[%s298] sm:$0xff] %v1297
        %1302 = vst [vmem:[%s298 + $0x8] sm:$0xff] %v1298
        %1303 = vst [vmem:[%s298 + $0x10] sm:$0xff] %v1299
        %1304 = vst [vmem:[%s298 + $0x18] sm:$0xff] %v1300
        %s1305 = scalar_lea.vmem [#allocation9], 8
        %v1306 = vld [vmem:[%s1305] sm:$0xf]
        %v1307 = vld [vmem:[%s1305 + $0x4] sm:$0xf]
        %v1308 = vld [vmem:[#allocation2] sm:$0xff]
        %v1309 = vld [vmem:[#allocation2 + $0x8] sm:$0xf]
        %v1310 = vld [vmem:[#allocation2 + $0x10] sm:$0xff]
        %v1311 = vld [vmem:[#allocation2 + $0x18] sm:$0xf]
        %v1314 = vunpack.c.l.b16 %v1306
        %v1315 = vunpack.c.l.b16 %v1307
        %v1316 = vpack.c.b16 %v1315, %v1314
        %v1321 = vunpack.c.l.b16 %v1308
        %v1322 = vunpack.c.h.b16 %v1308
        %v1323 = vunpack.c.l.b16 %v1309
        %v1324 = vunpack.c.l.b16 %v1310
        %v1325 = vunpack.c.h.b16 %v1310
        %v1326 = vunpack.c.l.b16 %v1311
        %v1327 = vpack.c.b16 %v1324, %v1321
        %v1328 = vpack.c.b16 %v1325, %v1322
        %v1329 = vpack.c.b16 %v1326, %v1323
        %1330 = vrot.lane.b32.xlu0 %v1327, 16
        %v1331 = vpop.permute.xlu0 %1330
        %1332 = vrot.lane.b32.xlu0 %v1328, 16
        %v1333 = vpop.permute.xlu0 %1332
        %1334 = vrot.lane.b32.xlu0 %v1329, 16
        %v1335 = vpop.permute.xlu0 %1334
        %v1336 = vsel %vm443, %v1331, %v1333
        %v1337 = vsel %vm443, %v1333, %v1335
        %v1341 = vsel %vm346, %v1316, 0
        %1343 = vmatprep.subr.bf16.mxu0 0
        %1344 = vmatpush1.bf16.msra.mxu0 0
        %1345 = vmatprep.subr.bf16.mxu0 0
        %1346 = vmatpush1.bf16.msra.mxu0 0
        %1347 = vmatprep.subr.bf16.mxu0 0
        %1348 = vmatpush1.bf16.msra.mxu0 0
        %1349 = vmatprep.subr.bf16.mxu0 0
        %1350 = vmatpush1.bf16.msra.mxu0 0
        %1351 = vmatprep.subr.bf16.mxu0 0
        %1352 = vmatpush1.bf16.msra.mxu0 0
        %1353 = vmatprep.subr.bf16.mxu0 0
        %1354 = vmatpush1.bf16.msra.mxu0 0
        %1355 = vmatprep.subr.bf16.mxu0 0
        %1356 = vmatpush1.bf16.msra.mxu0 0
        %1357 = vmatprep.subr.bf16.mxu0 %v1337
        %1358 = vmatpush1.bf16.msra.mxu0 %v1336
        %1359 = vmatprep.subr.bf16.mxu0 0
        %1360 = vmatpush2.bf16.msra.mxu0 0
        %1361 = vmatprep.subr.bf16.mxu0 0
        %1362 = vmatpush2.bf16.msra.mxu0 0
        %1363 = vmatprep.subr.bf16.mxu0 0
        %1364 = vmatpush2.bf16.msra.mxu0 0
        %1365 = vmatprep.subr.bf16.mxu0 0
        %1366 = vmatpush2.bf16.msra.mxu0 0
        %1367 = vmatprep.subr.bf16.mxu0 0
        %1368 = vmatpush2.bf16.msra.mxu0 0
        %1369 = vmatprep.subr.bf16.mxu0 0
        %1370 = vmatpush2.bf16.msra.mxu0 0
        %1371 = vmatprep.subr.bf16.mxu0 0
        %1372 = vmatpush2.bf16.msra.mxu0 0
        %1373 = vmatprep.subr.bf16.mxu0 0
        %1374 = vmatpush2.bf16.msra.mxu0 0
        %1375 = vmatprep.mubr.bf16.mxu0 0
        %1376 = vmatmul.mubr.bf16.gmra.mxu0 %v1341
        %v1377 = vpop.f32.mrf.mxu0
        %v1378 = vadd.f32 0.0, %v1377
        %v1379 = vpop.f32.mrf.mxu0
        %v1380 = vadd.f32 0.0, %v1379
        %v1381 = vpop.f32.mrf.mxu0
        %v1382 = vadd.f32 0.0, %v1381
        %v1383 = vpop.f32.mrf.mxu0
        %v1384 = vadd.f32 0.0, %v1383
        %1385 = vdwg.mxu0
        %v1386 = vld [vmem:[%s298] sm:$0xff]
        %v1387 = vld [vmem:[%s298 + $0x8] sm:$0xff]
        %v1388 = vld [vmem:[%s298 + $0x10] sm:$0xff]
        %v1389 = vld [vmem:[%s298 + $0x18] sm:$0xff]
        %v1390 = vadd.f32 %v1386, %v1378
        %v1391 = vadd.f32 %v1387, %v1380
        %v1392 = vadd.f32 %v1388, %v1382
        %v1393 = vadd.f32 %v1389, %v1384
        %1394 = vst [vmem:[%s298] sm:$0xff] %v1390
        %1395 = vst [vmem:[%s298 + $0x8] sm:$0xff] %v1391
        %1396 = vst [vmem:[%s298 + $0x10] sm:$0xff] %v1392
        %1397 = vst [vmem:[%s298 + $0x18] sm:$0xff] %v1393
        %s1398 = scalar_lea.vmem [#allocation9], 16
        %v1399 = vld [vmem:[%s1398] sm:$0xf]
        %v1400 = vld [vmem:[%s1398 + $0x4] sm:$0xf]
        %v1401 = vld [vmem:[#allocation2] sm:$0xff]
        %v1402 = vld [vmem:[#allocation2 + $0x8] sm:$0xf]
        %v1403 = vld [vmem:[#allocation2 + $0x10] sm:$0xff]
        %v1404 = vld [vmem:[#allocation2 + $0x18] sm:$0xf]
        %v1407 = vunpack.c.l.b16 %v1399
        %v1408 = vunpack.c.l.b16 %v1400
        %v1409 = vpack.c.b16 %v1408, %v1407
        %v1414 = vunpack.c.l.b16 %v1401
        %v1415 = vunpack.c.h.b16 %v1401
        %v1416 = vunpack.c.l.b16 %v1402
        %v1417 = vunpack.c.l.b16 %v1403
        %v1418 = vunpack.c.h.b16 %v1403
        %v1419 = vunpack.c.l.b16 %v1404
        %v1420 = vpack.c.b16 %v1417, %v1414
        %v1421 = vpack.c.b16 %v1418, %v1415
        %v1422 = vpack.c.b16 %v1419, %v1416
        %1423 = vrot.lane.b32.xlu0 %v1420, 15
        %v1424 = vpop.permute.xlu0 %1423
        %1425 = vrot.lane.b32.xlu0 %v1421, 15
        %v1426 = vpop.permute.xlu0 %1425
        %1427 = vrot.lane.b32.xlu0 %v1422, 15
        %v1428 = vpop.permute.xlu0 %1427
        %v1429 = vsel %vm537, %v1424, %v1426
        %v1430 = vsel %vm537, %v1426, %v1428
        %v1434 = vsel %vm346, %v1409, 0
        %1436 = vmatprep.subr.bf16.mxu0 0
        %1437 = vmatpush1.bf16.msra.mxu0 0
        %1438 = vmatprep.subr.bf16.mxu0 0
        %1439 = vmatpush1.bf16.msra.mxu0 0
        %1440 = vmatprep.subr.bf16.mxu0 0
        %1441 = vmatpush1.bf16.msra.mxu0 0
        %1442 = vmatprep.subr.bf16.mxu0 0
        %1443 = vmatpush1.bf16.msra.mxu0 0
        %1444 = vmatprep.subr.bf16.mxu0 0
        %1445 = vmatpush1.bf16.msra.mxu0 0
        %1446 = vmatprep.subr.bf16.mxu0 0
        %1447 = vmatpush1.bf16.msra.mxu0 0
        %1448 = vmatprep.subr.bf16.mxu0 0
        %1449 = vmatpush1.bf16.msra.mxu0 0
        %1450 = vmatprep.subr.bf16.mxu0 %v1430
        %1451 = vmatpush1.bf16.msra.mxu0 %v1429
        %1452 = vmatprep.subr.bf16.mxu0 0
        %1453 = vmatpush2.bf16.msra.mxu0 0
        %1454 = vmatprep.subr.bf16.mxu0 0
        %1455 = vmatpush2.bf16.msra.mxu0 0
        %1456 = vmatprep.subr.bf16.mxu0 0
        %1457 = vmatpush2.bf16.msra.mxu0 0
        %1458 = vmatprep.subr.bf16.mxu0 0
        %1459 = vmatpush2.bf16.msra.mxu0 0
        %1460 = vmatprep.subr.bf16.mxu0 0
        %1461 = vmatpush2.bf16.msra.mxu0 0
        %1462 = vmatprep.subr.bf16.mxu0 0
        %1463 = vmatpush2.bf16.msra.mxu0 0
        %1464 = vmatprep.subr.bf16.mxu0 0
        %1465 = vmatpush2.bf16.msra.mxu0 0
        %1466 = vmatprep.subr.bf16.mxu0 0
        %1467 = vmatpush2.bf16.msra.mxu0 0
        %1468 = vmatprep.mubr.bf16.mxu0 0
        %1469 = vmatmul.mubr.bf16.gmra.mxu0 %v1434
        %v1470 = vpop.f32.mrf.mxu0
        %v1471 = vadd.f32 0.0, %v1470
        %v1472 = vpop.f32.mrf.mxu0
        %v1473 = vadd.f32 0.0, %v1472
        %v1474 = vpop.f32.mrf.mxu0
        %v1475 = vadd.f32 0.0, %v1474
        %v1476 = vpop.f32.mrf.mxu0
        %v1477 = vadd.f32 0.0, %v1476
        %1478 = vdwg.mxu0
        %v1479 = vmul.f32 %v1471, %v592
        %v1480 = vmul.f32 %v1473, %v596
        %v1481 = vmul.f32 %v1475, %v592
        %v1482 = vmul.f32 %v1477, %v596
        %v1483 = vld [vmem:[%s298] sm:$0xff]
        %v1484 = vld [vmem:[%s298 + $0x8] sm:$0xff]
        %v1485 = vld [vmem:[%s298 + $0x10] sm:$0xff]
        %v1486 = vld [vmem:[%s298 + $0x18] sm:$0xff]
        %v1487 = vadd.f32 %v1483, %v1479
        %v1488 = vadd.f32 %v1484, %v1480
        %v1489 = vadd.f32 %v1485, %v1481
        %v1490 = vadd.f32 %v1486, %v1482
        %1491 = vst [vmem:[%s298] sm:$0xff] %v1487
        %1492 = vst [vmem:[%s298 + $0x8] sm:$0xff] %v1488
        %1493 = vst [vmem:[%s298 + $0x10] sm:$0xff] %v1489
        %1494 = vst [vmem:[%s298 + $0x18] sm:$0xff] %v1490
        %s1495 = scalar_lea.vmem [#allocation9], 24
        %v1496 = vld [vmem:[%s1495] sm:$0xf]
        %v1497 = vld [vmem:[%s1495 + $0x4] sm:$0xf]
        %v1498 = vld [vmem:[#allocation2] sm:$0xff]
        %v1499 = vld [vmem:[#allocation2 + $0x8] sm:$0xf]
        %v1500 = vld [vmem:[#allocation2 + $0x10] sm:$0xff]
        %v1501 = vld [vmem:[#allocation2 + $0x18] sm:$0xf]
        %v1504 = vunpack.c.l.b16 %v1496
        %v1505 = vunpack.c.l.b16 %v1497
        %v1506 = vpack.c.b16 %v1505, %v1504
        %v1511 = vunpack.c.l.b16 %v1498
        %v1512 = vunpack.c.h.b16 %v1498
        %v1513 = vunpack.c.l.b16 %v1499
        %v1514 = vunpack.c.l.b16 %v1500
        %v1515 = vunpack.c.h.b16 %v1500
        %v1516 = vunpack.c.l.b16 %v1501
        %v1517 = vpack.c.b16 %v1514, %v1511
        %v1518 = vpack.c.b16 %v1515, %v1512
        %v1519 = vpack.c.b16 %v1516, %v1513
        %1520 = vrot.lane.b32.xlu0 %v1517, 1
        %v1521 = vpop.permute.xlu0 %1520
        %1522 = vrot.lane.b32.xlu0 %v1518, 1
        %v1523 = vpop.permute.xlu0 %1522
        %1524 = vrot.lane.b32.xlu0 %v1519, 1
        %v1525 = vpop.permute.xlu0 %1524
        %v1526 = vsel %vm646, %v1521, %v1523
        %v1527 = vsel %vm646, %v1523, %v1525
        %v1531 = vsel %vm346, %v1506, 0
        %1533 = vmatprep.subr.bf16.mxu0 0
        %1534 = vmatpush1.bf16.msra.mxu0 0
        %1535 = vmatprep.subr.bf16.mxu0 0
        %1536 = vmatpush1.bf16.msra.mxu0 0
        %1537 = vmatprep.subr.bf16.mxu0 0
        %1538 = vmatpush1.bf16.msra.mxu0 0
        %1539 = vmatprep.subr.bf16.mxu0 0
        %1540 = vmatpush1.bf16.msra.mxu0 0
        %1541 = vmatprep.subr.bf16.mxu0 0
        %1542 = vmatpush1.bf16.msra.mxu0 0
        %1543 = vmatprep.subr.bf16.mxu0 0
        %1544 = vmatpush1.bf16.msra.mxu0 0
        %1545 = vmatprep.subr.bf16.mxu0 0
        %1546 = vmatpush1.bf16.msra.mxu0 0
        %1547 = vmatprep.subr.bf16.mxu0 %v1527
        %1548 = vmatpush1.bf16.msra.mxu0 %v1526
        %1549 = vmatprep.subr.bf16.mxu0 0
        %1550 = vmatpush2.bf16.msra.mxu0 0
        %1551 = vmatprep.subr.bf16.mxu0 0
        %1552 = vmatpush2.bf16.msra.mxu0 0
        %1553 = vmatprep.subr.bf16.mxu0 0
        %1554 = vmatpush2.bf16.msra.mxu0 0
        %1555 = vmatprep.subr.bf16.mxu0 0
        %1556 = vmatpush2.bf16.msra.mxu0 0
        %1557 = vmatprep.subr.bf16.mxu0 0
        %1558 = vmatpush2.bf16.msra.mxu0 0
        %1559 = vmatprep.subr.bf16.mxu0 0
        %1560 = vmatpush2.bf16.msra.mxu0 0
        %1561 = vmatprep.subr.bf16.mxu0 0
        %1562 = vmatpush2.bf16.msra.mxu0 0
        %1563 = vmatprep.subr.bf16.mxu0 0
        %1564 = vmatpush2.bf16.msra.mxu0 0
        %1565 = vmatprep.mubr.bf16.mxu0 0
        %1566 = vmatmul.mubr.bf16.gmra.mxu0 %v1531
        %v1567 = vpop.f32.mrf.mxu0
        %v1568 = vadd.f32 0.0, %v1567
        %v1569 = vpop.f32.mrf.mxu0
        %v1570 = vadd.f32 0.0, %v1569
        %v1571 = vpop.f32.mrf.mxu0
        %v1572 = vadd.f32 0.0, %v1571
        %v1573 = vpop.f32.mrf.mxu0
        %v1574 = vadd.f32 0.0, %v1573
        %1575 = vdwg.mxu0
        %v1576 = vmul.f32 %v1568, %v397
        %v1577 = vmul.f32 %v1570, %v401
        %v1578 = vmul.f32 %v1572, %v397
        %v1579 = vmul.f32 %v1574, %v401
        %v1580 = vld [vmem:[%s298] sm:$0xff]
        %v1581 = vld [vmem:[%s298 + $0x8] sm:$0xff]
        %v1582 = vld [vmem:[%s298 + $0x10] sm:$0xff]
        %v1583 = vld [vmem:[%s298 + $0x18] sm:$0xff]
        %v1584 = vadd.f32 %v1580, %v1576
        %v1585 = vadd.f32 %v1581, %v1577
        %v1586 = vadd.f32 %v1582, %v1578
        %v1587 = vadd.f32 %v1583, %v1579
        %1588 = vst [vmem:[%s298] sm:$0xff] %v1584
        %1589 = vst [vmem:[%s298 + $0x8] sm:$0xff] %v1585
        %1590 = vst [vmem:[%s298 + $0x10] sm:$0xff] %v1586
        %1591 = vst [vmem:[%s298 + $0x18] sm:$0xff] %v1587
        %s1592 = scalar_lea.vmem [#allocation9], 32
        %v1593 = vld [vmem:[%s1592] sm:$0xf]
        %v1594 = vld [vmem:[%s1592 + $0x4] sm:$0xf]
        %v1595 = vld [vmem:[#allocation2 + $0x4] sm:$0xff]
        %v1596 = vld [vmem:[#allocation2 + $0x14] sm:$0xff]
        %v1599 = vunpack.c.l.b16 %v1593
        %v1600 = vunpack.c.l.b16 %v1594
        %v1601 = vpack.c.b16 %v1600, %v1599
        %v1604 = vunpack.c.l.b16 %v1595
        %v1605 = vunpack.c.h.b16 %v1595
        %v1606 = vunpack.c.l.b16 %v1596
        %v1607 = vunpack.c.h.b16 %v1596
        %v1608 = vpack.c.b16 %v1606, %v1604
        %v1609 = vpack.c.b16 %v1607, %v1605
        %v1613 = vsel %vm346, %v1601, 0
        %1615 = vmatprep.subr.bf16.mxu0 0
        %1616 = vmatpush1.bf16.msra.mxu0 0
        %1617 = vmatprep.subr.bf16.mxu0 0
        %1618 = vmatpush1.bf16.msra.mxu0 0
        %1619 = vmatprep.subr.bf16.mxu0 0
        %1620 = vmatpush1.bf16.msra.mxu0 0
        %1621 = vmatprep.subr.bf16.mxu0 0
        %1622 = vmatpush1.bf16.msra.mxu0 0
        %1623 = vmatprep.subr.bf16.mxu0 0
        %1624 = vmatpush1.bf16.msra.mxu0 0
        %1625 = vmatprep.subr.bf16.mxu0 0
        %1626 = vmatpush1.bf16.msra.mxu0 0
        %1627 = vmatprep.subr.bf16.mxu0 0
        %1628 = vmatpush1.bf16.msra.mxu0 0
        %1629 = vmatprep.subr.bf16.mxu0 %v1609
        %1630 = vmatpush1.bf16.msra.mxu0 %v1608
        %1631 = vmatprep.subr.bf16.mxu0 0
        %1632 = vmatpush2.bf16.msra.mxu0 0
        %1633 = vmatprep.subr.bf16.mxu0 0
        %1634 = vmatpush2.bf16.msra.mxu0 0
        %1635 = vmatprep.subr.bf16.mxu0 0
        %1636 = vmatpush2.bf16.msra.mxu0 0
        %1637 = vmatprep.subr.bf16.mxu0 0
        %1638 = vmatpush2.bf16.msra.mxu0 0
        %1639 = vmatprep.subr.bf16.mxu0 0
        %1640 = vmatpush2.bf16.msra.mxu0 0
        %1641 = vmatprep.subr.bf16.mxu0 0
        %1642 = vmatpush2.bf16.msra.mxu0 0
        %1643 = vmatprep.subr.bf16.mxu0 0
        %1644 = vmatpush2.bf16.msra.mxu0 0
        %1645 = vmatprep.subr.bf16.mxu0 0
        %1646 = vmatpush2.bf16.msra.mxu0 0
        %1647 = vmatprep.mubr.bf16.mxu0 0
        %1648 = vmatmul.mubr.bf16.gmra.mxu0 %v1613
        %v1649 = vpop.f32.mrf.mxu0
        %v1650 = vadd.f32 0.0, %v1649
        %v1651 = vpop.f32.mrf.mxu0
        %v1652 = vadd.f32 0.0, %v1651
        %v1653 = vpop.f32.mrf.mxu0
        %v1654 = vadd.f32 0.0, %v1653
        %v1655 = vpop.f32.mrf.mxu0
        %v1656 = vadd.f32 0.0, %v1655
        %1657 = vdwg.mxu0
        %v1658 = vld [vmem:[%s298] sm:$0xff]
        %v1659 = vld [vmem:[%s298 + $0x8] sm:$0xff]
        %v1660 = vld [vmem:[%s298 + $0x10] sm:$0xff]
        %v1661 = vld [vmem:[%s298 + $0x18] sm:$0xff]
        %v1662 = vadd.f32 %v1658, %v1650
        %v1663 = vadd.f32 %v1659, %v1652
        %v1664 = vadd.f32 %v1660, %v1654
        %v1665 = vadd.f32 %v1661, %v1656
        %1666 = vst [vmem:[%s298] sm:$0xff] %v1662
        %1667 = vst [vmem:[%s298 + $0x8] sm:$0xff] %v1663
        %1668 = vst [vmem:[%s298 + $0x10] sm:$0xff] %v1664
        %1669 = vst [vmem:[%s298 + $0x18] sm:$0xff] %v1665
        %s1670 = scalar_lea.vmem [#allocation9], 40
        %v1671 = vld [vmem:[%s1670] sm:$0xf]
        %v1672 = vld [vmem:[%s1670 + $0x4] sm:$0xf]
        %v1673 = vld [vmem:[#allocation2 + $0x4] sm:$0xff]
        %v1674 = vld [vmem:[#allocation2 + $0xc] sm:$0xf]
        %v1675 = vld [vmem:[#allocation2 + $0x14] sm:$0xff]
        %v1676 = vld [vmem:[#allocation2 + $0x1c] sm:$0xf]
        %v1679 = vunpack.c.l.b16 %v1671
        %v1680 = vunpack.c.l.b16 %v1672
        %v1681 = vpack.c.b16 %v1680, %v1679
        %v1686 = vunpack.c.l.b16 %v1673
        %v1687 = vunpack.c.h.b16 %v1673
        %v1688 = vunpack.c.l.b16 %v1674
        %v1689 = vunpack.c.l.b16 %v1675
        %v1690 = vunpack.c.h.b16 %v1675
        %v1691 = vunpack.c.l.b16 %v1676
        %v1692 = vpack.c.b16 %v1689, %v1686
        %v1693 = vpack.c.b16 %v1690, %v1687
        %v1694 = vpack.c.b16 %v1691, %v1688
        %1695 = vrot.lane.b32.xlu0 %v1692, 127
        %v1696 = vpop.permute.xlu0 %1695
        %1697 = vrot.lane.b32.xlu0 %v1693, 127
        %v1698 = vpop.permute.xlu0 %1697
        %1699 = vrot.lane.b32.xlu0 %v1694, 127
        %v1700 = vpop.permute.xlu0 %1699
        %v1701 = vsel %vm822, %v1696, %v1698
        %v1702 = vsel %vm822, %v1698, %v1700
        %v1706 = vsel %vm346, %v1681, 0
        %1708 = vmatprep.subr.bf16.mxu0 0
        %1709 = vmatpush1.bf16.msra.mxu0 0
        %1710 = vmatprep.subr.bf16.mxu0 0
        %1711 = vmatpush1.bf16.msra.mxu0 0
        %1712 = vmatprep.subr.bf16.mxu0 0
        %1713 = vmatpush1.bf16.msra.mxu0 0
        %1714 = vmatprep.subr.bf16.mxu0 0
        %1715 = vmatpush1.bf16.msra.mxu0 0
        %1716 = vmatprep.subr.bf16.mxu0 0
        %1717 = vmatpush1.bf16.msra.mxu0 0
        %1718 = vmatprep.subr.bf16.mxu0 0
        %1719 = vmatpush1.bf16.msra.mxu0 0
        %1720 = vmatprep.subr.bf16.mxu0 0
        %1721 = vmatpush1.bf16.msra.mxu0 0
        %1722 = vmatprep.subr.bf16.mxu0 %v1702
        %1723 = vmatpush1.bf16.msra.mxu0 %v1701
        %1724 = vmatprep.subr.bf16.mxu0 0
        %1725 = vmatpush2.bf16.msra.mxu0 0
        %1726 = vmatprep.subr.bf16.mxu0 0
        %1727 = vmatpush2.bf16.msra.mxu0 0
        %1728 = vmatprep.subr.bf16.mxu0 0
        %1729 = vmatpush2.bf16.msra.mxu0 0
        %1730 = vmatprep.subr.bf16.mxu0 0
        %1731 = vmatpush2.bf16.msra.mxu0 0
        %1732 = vmatprep.subr.bf16.mxu0 0
        %1733 = vmatpush2.bf16.msra.mxu0 0
        %1734 = vmatprep.subr.bf16.mxu0 0
        %1735 = vmatpush2.bf16.msra.mxu0 0
        %1736 = vmatprep.subr.bf16.mxu0 0
        %1737 = vmatpush2.bf16.msra.mxu0 0
        %1738 = vmatprep.subr.bf16.mxu0 0
        %1739 = vmatpush2.bf16.msra.mxu0 0
        %1740 = vmatprep.mubr.bf16.mxu0 0
        %1741 = vmatmul.mubr.bf16.gmra.mxu0 %v1706
        %v1742 = vpop.f32.mrf.mxu0
        %v1743 = vadd.f32 0.0, %v1742
        %v1744 = vpop.f32.mrf.mxu0
        %v1745 = vadd.f32 0.0, %v1744
        %v1746 = vpop.f32.mrf.mxu0
        %v1747 = vadd.f32 0.0, %v1746
        %v1748 = vpop.f32.mrf.mxu0
        %v1749 = vadd.f32 0.0, %v1748
        %1750 = vdwg.mxu0
        %v1751 = vmul.f32 %v1743, %v592
        %v1752 = vmul.f32 %v1745, %v596
        %v1753 = vmul.f32 %v1747, %v592
        %v1754 = vmul.f32 %v1749, %v596
        %v1755 = vld [vmem:[%s298] sm:$0xff]
        %v1756 = vld [vmem:[%s298 + $0x8] sm:$0xff]
        %v1757 = vld [vmem:[%s298 + $0x10] sm:$0xff]
        %v1758 = vld [vmem:[%s298 + $0x18] sm:$0xff]
        %v1759 = vadd.f32 %v1755, %v1751
        %v1760 = vadd.f32 %v1756, %v1752
        %v1761 = vadd.f32 %v1757, %v1753
        %v1762 = vadd.f32 %v1758, %v1754
        %1763 = vst [vmem:[%s298] sm:$0xff] %v1759
        %1764 = vst [vmem:[%s298 + $0x8] sm:$0xff] %v1760
        %1765 = vst [vmem:[%s298 + $0x10] sm:$0xff] %v1761
        %1766 = vst [vmem:[%s298 + $0x18] sm:$0xff] %v1762
        %s1767 = scalar_lea.vmem [#allocation9], 48
        %v1768 = vld [vmem:[%s1767] sm:$0xf]
        %v1769 = vld [vmem:[%s1767 + $0x4] sm:$0xf]
        %v1770 = vld [vmem:[#allocation2 + $0x4] sm:$0xff]
        %v1771 = vld [vmem:[#allocation2 + $0xc] sm:$0xf]
        %v1772 = vld [vmem:[#allocation2 + $0x14] sm:$0xff]
        %v1773 = vld [vmem:[#allocation2 + $0x1c] sm:$0xf]
        %v1776 = vunpack.c.l.b16 %v1768
        %v1777 = vunpack.c.l.b16 %v1769
        %v1778 = vpack.c.b16 %v1777, %v1776
        %v1783 = vunpack.c.l.b16 %v1770
        %v1784 = vunpack.c.h.b16 %v1770
        %v1785 = vunpack.c.l.b16 %v1771
        %v1786 = vunpack.c.l.b16 %v1772
        %v1787 = vunpack.c.h.b16 %v1772
        %v1788 = vunpack.c.l.b16 %v1773
        %v1789 = vpack.c.b16 %v1786, %v1783
        %v1790 = vpack.c.b16 %v1787, %v1784
        %v1791 = vpack.c.b16 %v1788, %v1785
        %1792 = vrot.lane.b32.xlu0 %v1789, 113
        %v1793 = vpop.permute.xlu0 %1792
        %1794 = vrot.lane.b32.xlu0 %v1790, 113
        %v1795 = vpop.permute.xlu0 %1794
        %1796 = vrot.lane.b32.xlu0 %v1791, 113
        %v1797 = vpop.permute.xlu0 %1796
        %v1798 = vsel %vm920, %v1793, %v1795
        %v1799 = vsel %vm920, %v1795, %v1797
        %v1803 = vsel %vm346, %v1778, 0
        %1805 = vmatprep.subr.bf16.mxu0 0
        %1806 = vmatpush1.bf16.msra.mxu0 0
        %1807 = vmatprep.subr.bf16.mxu0 0
        %1808 = vmatpush1.bf16.msra.mxu0 0
        %1809 = vmatprep.subr.bf16.mxu0 0
        %1810 = vmatpush1.bf16.msra.mxu0 0
        %1811 = vmatprep.subr.bf16.mxu0 0
        %1812 = vmatpush1.bf16.msra.mxu0 0
        %1813 = vmatprep.subr.bf16.mxu0 0
        %1814 = vmatpush1.bf16.msra.mxu0 0
        %1815 = vmatprep.subr.bf16.mxu0 0
        %1816 = vmatpush1.bf16.msra.mxu0 0
        %1817 = vmatprep.subr.bf16.mxu0 0
        %1818 = vmatpush1.bf16.msra.mxu0 0
        %1819 = vmatprep.subr.bf16.mxu0 %v1799
        %1820 = vmatpush1.bf16.msra.mxu0 %v1798
        %1821 = vmatprep.subr.bf16.mxu0 0
        %1822 = vmatpush2.bf16.msra.mxu0 0
        %1823 = vmatprep.subr.bf16.mxu0 0
        %1824 = vmatpush2.bf16.msra.mxu0 0
        %1825 = vmatprep.subr.bf16.mxu0 0
        %1826 = vmatpush2.bf16.msra.mxu0 0
        %1827 = vmatprep.subr.bf16.mxu0 0
        %1828 = vmatpush2.bf16.msra.mxu0 0
        %1829 = vmatprep.subr.bf16.mxu0 0
        %1830 = vmatpush2.bf16.msra.mxu0 0
        %1831 = vmatprep.subr.bf16.mxu0 0
        %1832 = vmatpush2.bf16.msra.mxu0 0
        %1833 = vmatprep.subr.bf16.mxu0 0
        %1834 = vmatpush2.bf16.msra.mxu0 0
        %1835 = vmatprep.subr.bf16.mxu0 0
        %1836 = vmatpush2.bf16.msra.mxu0 0
        %1837 = vmatprep.mubr.bf16.mxu0 0
        %1838 = vmatmul.mubr.bf16.gmra.mxu0 %v1803
        %v1839 = vpop.f32.mrf.mxu0
        %v1840 = vadd.f32 0.0, %v1839
        %v1841 = vpop.f32.mrf.mxu0
        %v1842 = vadd.f32 0.0, %v1841
        %v1843 = vpop.f32.mrf.mxu0
        %v1844 = vadd.f32 0.0, %v1843
        %v1845 = vpop.f32.mrf.mxu0
        %v1846 = vadd.f32 0.0, %v1845
        %1847 = vdwg.mxu0
        %v1848 = vmul.f32 %v1840, %v397
        %v1849 = vmul.f32 %v1842, %v401
        %v1850 = vmul.f32 %v1844, %v397
        %v1851 = vmul.f32 %v1846, %v401
        %v1852 = vld [vmem:[%s298] sm:$0xff]
        %v1853 = vld [vmem:[%s298 + $0x8] sm:$0xff]
        %v1854 = vld [vmem:[%s298 + $0x10] sm:$0xff]
        %v1855 = vld [vmem:[%s298 + $0x18] sm:$0xff]
        %v1856 = vadd.f32 %v1852, %v1848
        %v1857 = vadd.f32 %v1853, %v1849
        %v1858 = vadd.f32 %v1854, %v1850
        %v1859 = vadd.f32 %v1855, %v1851
        %1860 = vst [vmem:[%s298] sm:$0xff] %v1856
        %1861 = vst [vmem:[%s298 + $0x8] sm:$0xff] %v1857
        %1862 = vst [vmem:[%s298 + $0x10] sm:$0xff] %v1858
        %1863 = vst [vmem:[%s298 + $0x18] sm:$0xff] %v1859
        %s1864 = scalar_lea.vmem [#allocation9], 56
        %v1865 = vld [vmem:[%s1864] sm:$0xf]
        %v1866 = vld [vmem:[%s1864 + $0x4] sm:$0xf]
        %v1867 = vld [vmem:[#allocation2 + $0x4] sm:$0xff]
        %v1868 = vld [vmem:[#allocation2 + $0xc] sm:$0xf]
        %v1869 = vld [vmem:[#allocation2 + $0x14] sm:$0xff]
        %v1870 = vld [vmem:[#allocation2 + $0x1c] sm:$0xf]
        %v1873 = vunpack.c.l.b16 %v1865
        %v1874 = vunpack.c.l.b16 %v1866
        %v1875 = vpack.c.b16 %v1874, %v1873
        %v1880 = vunpack.c.l.b16 %v1867
        %v1881 = vunpack.c.h.b16 %v1867
        %v1882 = vunpack.c.l.b16 %v1868
        %v1883 = vunpack.c.l.b16 %v1869
        %v1884 = vunpack.c.h.b16 %v1869
        %v1885 = vunpack.c.l.b16 %v1870
        %v1886 = vpack.c.b16 %v1883, %v1880
        %v1887 = vpack.c.b16 %v1884, %v1881
        %v1888 = vpack.c.b16 %v1885, %v1882
        %1889 = vrot.lane.b32.xlu0 %v1886, 112
        %v1890 = vpop.permute.xlu0 %1889
        %1891 = vrot.lane.b32.xlu0 %v1887, 112
        %v1892 = vpop.permute.xlu0 %1891
        %1893 = vrot.lane.b32.xlu0 %v1888, 112
        %v1894 = vpop.permute.xlu0 %1893
        %v1895 = vsel %vm1018, %v1890, %v1892
        %v1896 = vsel %vm1018, %v1892, %v1894
        %v1900 = vsel %vm346, %v1875, 0
        %1902 = vmatprep.subr.bf16.mxu0 0
        %1903 = vmatpush1.bf16.msra.mxu0 0
        %1904 = vmatprep.subr.bf16.mxu0 0
        %1905 = vmatpush1.bf16.msra.mxu0 0
        %1906 = vmatprep.subr.bf16.mxu0 0
        %1907 = vmatpush1.bf16.msra.mxu0 0
        %1908 = vmatprep.subr.bf16.mxu0 0
        %1909 = vmatpush1.bf16.msra.mxu0 0
        %1910 = vmatprep.subr.bf16.mxu0 0
        %1911 = vmatpush1.bf16.msra.mxu0 0
        %1912 = vmatprep.subr.bf16.mxu0 0
        %1913 = vmatpush1.bf16.msra.mxu0 0
        %1914 = vmatprep.subr.bf16.mxu0 0
        %1915 = vmatpush1.bf16.msra.mxu0 0
        %1916 = vmatprep.subr.bf16.mxu0 %v1896
        %1917 = vmatpush1.bf16.msra.mxu0 %v1895
        %1918 = vmatprep.subr.bf16.mxu0 0
        %1919 = vmatpush2.bf16.msra.mxu0 0
        %1920 = vmatprep.subr.bf16.mxu0 0
        %1921 = vmatpush2.bf16.msra.mxu0 0
        %1922 = vmatprep.subr.bf16.mxu0 0
        %1923 = vmatpush2.bf16.msra.mxu0 0
        %1924 = vmatprep.subr.bf16.mxu0 0
        %1925 = vmatpush2.bf16.msra.mxu0 0
        %1926 = vmatprep.subr.bf16.mxu0 0
        %1927 = vmatpush2.bf16.msra.mxu0 0
        %1928 = vmatprep.subr.bf16.mxu0 0
        %1929 = vmatpush2.bf16.msra.mxu0 0
        %1930 = vmatprep.subr.bf16.mxu0 0
        %1931 = vmatpush2.bf16.msra.mxu0 0
        %1932 = vmatprep.subr.bf16.mxu0 0
        %1933 = vmatpush2.bf16.msra.mxu0 0
        %1934 = vmatprep.mubr.bf16.mxu0 0
        %1935 = vmatmul.mubr.bf16.gmra.mxu0 %v1900
        %v1936 = vpop.f32.mrf.mxu0
        %v1937 = vadd.f32 0.0, %v1936
        %v1938 = vpop.f32.mrf.mxu0
        %v1939 = vadd.f32 0.0, %v1938
        %v1940 = vpop.f32.mrf.mxu0
        %v1941 = vadd.f32 0.0, %v1940
        %v1942 = vpop.f32.mrf.mxu0
        %v1943 = vadd.f32 0.0, %v1942
        %1944 = vdwg.mxu0
        %v1945 = vld [vmem:[%s298] sm:$0xff]
        %v1946 = vld [vmem:[%s298 + $0x8] sm:$0xff]
        %v1947 = vld [vmem:[%s298 + $0x10] sm:$0xff]
        %v1948 = vld [vmem:[%s298 + $0x18] sm:$0xff]
        %v1949 = vadd.f32 %v1945, %v1937
        %v1950 = vadd.f32 %v1946, %v1939
        %v1951 = vadd.f32 %v1947, %v1941
        %v1952 = vadd.f32 %v1948, %v1943
        %1953 = vst [vmem:[%s298] sm:$0xff] %v1949
        %1954 = vst [vmem:[%s298 + $0x8] sm:$0xff] %v1950
        %1955 = vst [vmem:[%s298 + $0x10] sm:$0xff] %v1951
        %1956 = vst [vmem:[%s298 + $0x18] sm:$0xff] %v1952
        %s1957 = scalar_lea.vmem [#allocation9], 64
        %v1958 = vld [vmem:[%s1957] sm:$0xf]
        %v1959 = vld [vmem:[%s1957 + $0x4] sm:$0xf]
        %v1960 = vld [vmem:[#allocation2 + $0x4] sm:$0xff]
        %v1961 = vld [vmem:[#allocation2 + $0xc] sm:$0xf]
        %v1962 = vld [vmem:[#allocation2 + $0x14] sm:$0xff]
        %v1963 = vld [vmem:[#allocation2 + $0x1c] sm:$0xf]
        %v1966 = vunpack.c.l.b16 %v1958
        %v1967 = vunpack.c.l.b16 %v1959
        %v1968 = vpack.c.b16 %v1967, %v1966
        %v1973 = vunpack.c.l.b16 %v1960
        %v1974 = vunpack.c.h.b16 %v1960
        %v1975 = vunpack.c.l.b16 %v1961
        %v1976 = vunpack.c.l.b16 %v1962
        %v1977 = vunpack.c.h.b16 %v1962
        %v1978 = vunpack.c.l.b16 %v1963
        %v1979 = vpack.c.b16 %v1976, %v1973
        %v1980 = vpack.c.b16 %v1977, %v1974
        %v1981 = vpack.c.b16 %v1978, %v1975
        %1982 = vrot.lane.b32.xlu0 %v1979, 111
        %v1983 = vpop.permute.xlu0 %1982
        %1984 = vrot.lane.b32.xlu0 %v1980, 111
        %v1985 = vpop.permute.xlu0 %1984
        %1986 = vrot.lane.b32.xlu0 %v1981, 111
        %v1987 = vpop.permute.xlu0 %1986
        %v1988 = vsel %vm1112, %v1983, %v1985
        %v1989 = vsel %vm1112, %v1985, %v1987
        %v1993 = vsel %vm346, %v1968, 0
        %1995 = vmatprep.subr.bf16.mxu0 0
        %1996 = vmatpush1.bf16.msra.mxu0 0
        %1997 = vmatprep.subr.bf16.mxu0 0
        %1998 = vmatpush1.bf16.msra.mxu0 0
        %1999 = vmatprep.subr.bf16.mxu0 0
        %2000 = vmatpush1.bf16.msra.mxu0 0
        %2001 = vmatprep.subr.bf16.mxu0 0
        %2002 = vmatpush1.bf16.msra.mxu0 0
        %2003 = vmatprep.subr.bf16.mxu0 0
        %2004 = vmatpush1.bf16.msra.mxu0 0
        %2005 = vmatprep.subr.bf16.mxu0 0
        %2006 = vmatpush1.bf16.msra.mxu0 0
        %2007 = vmatprep.subr.bf16.mxu0 0
        %2008 = vmatpush1.bf16.msra.mxu0 0
        %2009 = vmatprep.subr.bf16.mxu0 %v1989
        %2010 = vmatpush1.bf16.msra.mxu0 %v1988
        %2011 = vmatprep.subr.bf16.mxu0 0
        %2012 = vmatpush2.bf16.msra.mxu0 0
        %2013 = vmatprep.subr.bf16.mxu0 0
        %2014 = vmatpush2.bf16.msra.mxu0 0
        %2015 = vmatprep.subr.bf16.mxu0 0
        %2016 = vmatpush2.bf16.msra.mxu0 0
        %2017 = vmatprep.subr.bf16.mxu0 0
        %2018 = vmatpush2.bf16.msra.mxu0 0
        %2019 = vmatprep.subr.bf16.mxu0 0
        %2020 = vmatpush2.bf16.msra.mxu0 0
        %2021 = vmatprep.subr.bf16.mxu0 0
        %2022 = vmatpush2.bf16.msra.mxu0 0
        %2023 = vmatprep.subr.bf16.mxu0 0
        %2024 = vmatpush2.bf16.msra.mxu0 0
        %2025 = vmatprep.subr.bf16.mxu0 0
        %2026 = vmatpush2.bf16.msra.mxu0 0
        %2027 = vmatprep.mubr.bf16.mxu0 0
        %2028 = vmatmul.mubr.bf16.gmra.mxu0 %v1993
        %v2029 = vpop.f32.mrf.mxu0
        %v2030 = vadd.f32 0.0, %v2029
        %v2031 = vpop.f32.mrf.mxu0
        %v2032 = vadd.f32 0.0, %v2031
        %v2033 = vpop.f32.mrf.mxu0
        %v2034 = vadd.f32 0.0, %v2033
        %v2035 = vpop.f32.mrf.mxu0
        %v2036 = vadd.f32 0.0, %v2035
        %2037 = vdwg.mxu0
        %v2038 = vmul.f32 %v2030, %v592
        %v2039 = vmul.f32 %v2032, %v596
        %v2040 = vmul.f32 %v2034, %v592
        %v2041 = vmul.f32 %v2036, %v596
        %v2042 = vld [vmem:[%s298] sm:$0xff]
        %v2043 = vld [vmem:[%s298 + $0x8] sm:$0xff]
        %v2044 = vld [vmem:[%s298 + $0x10] sm:$0xff]
        %v2045 = vld [vmem:[%s298 + $0x18] sm:$0xff]
        %v2046 = vadd.f32 %v2042, %v2038
        %v2047 = vadd.f32 %v2043, %v2039
        %v2048 = vadd.f32 %v2044, %v2040
        %v2049 = vadd.f32 %v2045, %v2041
        %2050 = vst [vmem:[%s298] sm:$0xff] %v2046
        %2051 = vst [vmem:[%s298 + $0x8] sm:$0xff] %v2047
        %2052 = vst [vmem:[%s298 + $0x10] sm:$0xff] %v2048
        %2053 = vst [vmem:[%s298 + $0x18] sm:$0xff] %v2049
        %v2054 = vld [vmem:[%s298] sm:$0xff]
        %v2055 = vld [vmem:[%s298 + $0x8] sm:$0xff]
        %v2056 = vld [vmem:[%s298 + $0x10] sm:$0xff]
        %v2057 = vld [vmem:[%s298 + $0x18] sm:$0xff]
        %v2058 = vld [vmem:[%s4] sm:$0xff]
        %v2059 = vld [vmem:[%s4 + $0x8] sm:$0xff]
        %2061 = vset.pattern.permute.xlu0 0
        %2062 = vperm.xlu0 %2061, %v2058
        %v2063 = vpop.permute.xlu0 %2062
        %2066 = vset.pattern.permute.xlu0 0
        %2067 = vperm.xlu0 %2066, %v2059
        %v2068 = vpop.permute.xlu0 %2067
        %v2070 = vadd.f32 %v2054, %v2063
        %v2071 = vadd.f32 %v2055, %v2063
        %v2072 = vadd.f32 %v2056, %v2068
        %v2073 = vadd.f32 %v2057, %v2068
        %v2074 = vmax.f32 %v2070, 0.0
        %v2075 = vmax.f32 %v2071, 0.0
        %v2076 = vmax.f32 %v2072, 0.0
        %v2077 = vmax.f32 %v2073, 0.0
        %2078 = vst [vmem:[%s298] sm:$0xff] %v2074
        %2079 = vst [vmem:[%s298 + $0x8] sm:$0xff] %v2075
        %2080 = vst [vmem:[%s298 + $0x10] sm:$0xff] %v2076
        %2081 = vst [vmem:[%s298 + $0x18] sm:$0xff] %v2077
        %s2082 = sand.u32 %s163, 1
        %s2083 = scalar_lea.sflag [#allocation6], %s2082
        %s2084 = sand.u32 %s163, 1
        %s2085 = smul.addr %s2084, 32
        %s2086 = scalar_lea.vmem [#allocation10], %s2085
        // Predicated region
        $region61: #{tpu_custom_call.1} parent=43 // pred_check
          %p2087 = pneg %p173
        $region62: #{tpu_custom_call.1} parent=43 // pred_check_branch
          %2089 = sbr.rel (%p2087) target = $region64
        $region63: #{tpu_custom_call.1} parent=43 // pred_region
          %s2091 = ssub.s32 512, 512
          %2092 = vsyncadd %s2083, %s2091
          %s2093 = smul.addr %s24, 4
          %s2094 = smul.addr %s2093, 128
          %s2095 = scalar_lea.hbm %s6, %s2094
          %s2096 = sshll.u32 %s2086, 4
          %s2097 = int_to_ptr.vmem [resolvable:$true] %s2096
          %2102 = dma.vmem_to_hbm [thread:$0]  %s2097, 512, %s2095, %s2083, 256, 256, 16
        $region64: #{tpu_custom_call.1} parent=43 // pred_fallthru
          _
      $region44: #{tpu_custom_call.1} parent=5 // pred_fallthru
        _
      %p2103 = scmp.le.s32.totalorder 2, %s19
      // Predicated region
      $region65: #{tpu_custom_call.1} parent=5 // pred_check
        %p2104 = pneg %p2103
      $region66: #{tpu_custom_call.1} parent=5 // pred_check_branch
        %2106 = sbr.rel (%p2104) target = $region68
      $region67: #{tpu_custom_call.1} parent=5 // pred_region
        %s2107 = ssub.s32 %s19, 2
        // Predicated region
        $region69: #{tpu_custom_call.1} parent=67 // pred_check
          %p2108 = pneg %p179
        $region70: #{tpu_custom_call.1} parent=67 // pred_check_branch
          %2110 = sbr.rel (%p2108) target = $region72
        $region71: #{tpu_custom_call.1} parent=67 // pred_region
          %s2111 = sand.u32 %s164, 1
          %s2112 = scalar_lea.sflag [#allocation6], %s2111
          %s2113 = sand.u32 %s164, 1
          %s2114 = smul.addr %s2113, 32
          %s2115 = scalar_lea.vmem [#allocation10], %s2114
          %2116 = dma.done %s2112, 512
        $region72: #{tpu_custom_call.1} parent=67 // pred_fallthru
          _
      $region68: #{tpu_custom_call.1} parent=5 // pred_fallthru
        _
    $region6: #{tpu_custom_call.1} parent=1 // loop_footer
      %s23 = sadd.s32 1, %s19
    $region7: #{tpu_custom_call.1} parent=1 // loop_footer_branch
      %18 = sbr.rel target = $region3
    $region8: #{tpu_custom_call.1} parent=1 // loop_exit
      _
    %2117 = vsyncpa [#allocation5], 1
    %s2118 = scalar_lea.sflag [#allocation5], 1
    %2119 = vsyncpa %s2118, 1
    %2120 = vsyncpa [#allocation8], 1
    %2121 = vsyncpa [#allocation6], 1
    %s2122 = scalar_lea.sflag [#allocation6], 1
    %2123 = vsyncpa %s2122, 1

</llo_original>
